<compile_context>
chip_gen: v7x
topology: tpu7x:2x2x1
jax: 0.10.0
libtpu: 0.0.40
codegen_flags: <defaults>
</compile_context>

<pallas_src>
import jax
import jax.numpy as jnp
import numpy as np
from jax.experimental import pallas as pl
from jax.experimental.pallas import tpu as pltpu

# ----------------------------- model config ---------------------------------
OUTPUT_DIM = 16      # vocabulary size
EMBEDDING_DIM = 32
HIDDEN_DIM = 32
N_LAYERS = 2
DROPOUT = 0.0        # eval mode -> dropout is identity anyway
BATCH = 4

_HIGHEST = jax.lax.Precision.HIGHEST
_VMEM = pl.BlockSpec(memory_space=pltpu.MemorySpace.VMEM)
_SMEM = pl.BlockSpec(memory_space=pltpu.MemorySpace.SMEM)


# ------------------------------ fused Pallas kernel ---------------------------
def _decoder_fused_kernel(tok_ref, emb_ref, w_ref, b_ref, h0_ref, c0_ref,
                          wout_ref, bout_ref,
                          pred_ref, h_out_ref, c_out_ref,
                          x_scratch):
    """Fused: embedding gather -> N_LAYERS LSTM cells (seq_len=1) -> fc_out.

    tok:    [B]          int32, SMEM
    emb:    [V, E]       f32 (VMEM-resident table)
    w:      [L, E+H, 4H] f32, rows = [W_ih_t ; W_hh_t], cols permuted to [i,f,o,g]
    b:      [L, 1, 4H]   f32, b_ih + b_hh, same column permutation
    h0,c0:  [L, B, H]    f32
    wout:   [H, V]       f32 (fc_out.weight transposed)
    bout:   [1, V]       f32
    outputs: pred [B, V], h_out [L, B, H], c_out [L, B, H]
    """
    B, E = x_scratch.shape
    L, _, H = h0_ref.shape

    # ---- embedding lookup (exact in-kernel gather, tokens from SMEM) --------
    for b in range(B):
        tok_b = tok_ref[b]
        x_scratch[pl.ds(b, 1), :] = emb_ref[pl.ds(tok_b, 1), :]
    x = x_scratch[...]                                           # [B, E]
    # self.dropout(embedded) is identity in eval mode.

    # ---- stacked LSTM layers (unrolled; seq_len == 1) ------------------------
    for layer in range(L):
        xh = jnp.concatenate([x, h0_ref[layer]], axis=-1)        # [B, E+H]
        gates = jnp.dot(xh, w_ref[layer],
                        precision=_HIGHEST,
                        preferred_element_type=jnp.float32) + b_ref[layer]   # [B, 4H]
        # gate columns pre-permuted to [i, f, o, g]:
        sig = jax.nn.sigmoid(gates[:, :3 * H])                   # one EUP launch
        i_g = sig[:, 0 * H:1 * H]
        f_g = sig[:, 1 * H:2 * H]
        o_g = sig[:, 2 * H:3 * H]
        g_g = jnp.tanh(gates[:, 3 * H:4 * H])                    # one EUP launch
        c_new = f_g * c0_ref[layer] + i_g * g_g
        h_new = o_g * jnp.tanh(c_new)
        c_out_ref[layer] = c_new
        h_out_ref[layer] = h_new
        x = h_new  # inter-layer dropout is identity in eval mode

    # ---- fc_out --------------------------------------------------------------
    pred_ref[...] = jnp.dot(x, wout_ref[...],
                            precision=_HIGHEST,
                            preferred_element_type=jnp.float32) + bout_ref[...]


@jax.jit
def decoder_forward(fused, tokens, cell, hidden):
    """Mirrors Decoder.forward(input, cell, hidden); returns (pred, hidden, cell)."""
    B = tokens.shape[0]
    out_shape = (jax.ShapeDtypeStruct((B, OUTPUT_DIM), jnp.float32),
                 jax.ShapeDtypeStruct((N_LAYERS, B, HIDDEN_DIM), jnp.float32),
                 jax.ShapeDtypeStruct((N_LAYERS, B, HIDDEN_DIM), jnp.float32))
    pred, h_new, c_new = pl.pallas_call(
        _decoder_fused_kernel,
        out_shape=out_shape,
        in_specs=[_SMEM,    # tokens
                  _VMEM,    # embedding table [V, E]
                  _VMEM,    # stacked gate weights [L, E+H, 4H]
                  _VMEM,    # stacked gate biases  [L, 1, 4H]
                  _VMEM,    # hidden (h0) [L, B, H]
                  _VMEM,    # cell   (c0) [L, B, H]
                  _VMEM,    # w_out_t [H, V]
                  _VMEM],   # b_out   [1, V]
        out_specs=(_VMEM, _VMEM, _VMEM),
        scratch_shapes=[pltpu.VMEM((B, EMBEDDING_DIM), jnp.float32)],
    )(tokens.astype(jnp.int32), fused["embedding"], fused["w_gates_t"],
      fused["b_gates"], hidden, cell, fused["w_out_t"], fused["b_out"])
    return pred, h_new, c_new


# ----------------------------- parameter init --------------------------------
def init_raw_params(key):
    """Deterministic synthetic parameters in PyTorch layouts/gate order."""
    raw = {}
    ki = iter(jax.random.split(key, 4 + 4 * N_LAYERS))

    def u(kk, shape, bound):
        return jax.random.uniform(kk, shape, jnp.float32, -bound, bound)

    raw["embedding"] = u(next(ki), (OUTPUT_DIM, EMBEDDING_DIM), 0.5)

    bound = 1.0 / np.sqrt(HIDDEN_DIM)
    raw["w_ih"], raw["w_hh"], raw["b_ih"], raw["b_hh"] = [], [], [], []
    for layer in range(N_LAYERS):
        in_dim = EMBEDDING_DIM if layer == 0 else HIDDEN_DIM
        raw["w_ih"].append(u(next(ki), (4 * HIDDEN_DIM, in_dim), bound))      # [4H, I]
        raw["w_hh"].append(u(next(ki), (4 * HIDDEN_DIM, HIDDEN_DIM), bound))  # [4H, H]
        raw["b_ih"].append(u(next(ki), (4 * HIDDEN_DIM,), bound))
        raw["b_hh"].append(u(next(ki), (4 * HIDDEN_DIM,), bound))

    raw["w_out"] = u(next(ki), (OUTPUT_DIM, HIDDEN_DIM), bound)               # fc_out.weight
    raw["b_out"] = u(next(ki), (OUTPUT_DIM,), bound)                          # fc_out.bias
    return raw


def prepare_fused_params(raw):
    """Transpose, fuse x/h weights, stack layers, permute gates [i,f,g,o]->[i,f,o,g]."""
    H = HIDDEN_DIM
    perm = np.concatenate([np.arange(0, 2 * H),          # i, f
                           np.arange(3 * H, 4 * H),      # o
                           np.arange(2 * H, 3 * H)])     # g
    w_list, b_list = [], []
    for layer in range(N_LAYERS):
        wih_t = raw["w_ih"][layer].T                                   # [I, 4H]
        whh_t = raw["w_hh"][layer].T                                   # [H, 4H]
        w_cat = jnp.concatenate([wih_t, whh_t], axis=0)                # [I+H, 4H]
        b_cat = (raw["b_ih"][layer] + raw["b_hh"][layer]).reshape(1, 4 * H)
        w_list.append(w_cat[:, perm])
        b_list.append(b_cat[:, perm])
    return {
        "embedding": raw["embedding"],                                 # [V, E]
        "w_gates_t": jnp.stack(w_list),                                # [L, E+H, 4H]
        "b_gates": jnp.stack(b_list),                                  # [L, 1, 4H]
        "w_out_t": raw["w_out"].T,                                     # [H, V]
        "b_out": raw["b_out"].reshape(1, OUTPUT_DIM),                  # [1, V]
    }


# -------------------------- pure-JAX reference (check) -----------------------
def decoder_reference(raw, tokens, cell, hidden):
    """Faithful PyTorch-semantics reference (gate order [i,f,g,o])."""
    H = HIDDEN_DIM
    x = jnp.take(raw["embedding"], tokens, axis=0)
    new_h, new_c = [], []
    for layer in range(N_LAYERS):
        gates = (jnp.dot(x, raw["w_ih"][layer].T, precision=_HIGHEST)
                 + jnp.dot(hidden[layer], raw["w_hh"][layer].T, precision=_HIGHEST)
                 + raw["b_ih"][layer] + raw["b_hh"][layer])
        i_g = jax.nn.sigmoid(gates[:, 0 * H:1 * H])
        f_g = jax.nn.sigmoid(gates[:, 1 * H:2 * H])
        g_g = jnp.tanh(gates[:, 2 * H:3 * H])
        o_g = jax.nn.sigmoid(gates[:, 3 * H:4 * H])
        c_l = f_g * cell[layer] + i_g * g_g
        h_l = o_g * jnp.tanh(c_l)
        new_h.append(h_l)
        new_c.append(c_l)
        x = h_l
    pred = jnp.dot(x, raw["w_out"].T, precision=_HIGHEST) + raw["b_out"]
    return pred, jnp.stack(new_h), jnp.stack(new_c)


# ------------------------------------ main ------------------------------------
if __name__ == "__main__":
    key = jax.random.PRNGKey(0)
    k_param, k_tok, k_h, k_c = jax.random.split(key, 4)

    raw = init_raw_params(k_param)
    fused = prepare_fused_params(raw)

    tokens = jax.random.randint(k_tok, (BATCH,), 0, OUTPUT_DIM, dtype=jnp.int32)
    hidden0 = jax.random.normal(k_h, (N_LAYERS, BATCH, HIDDEN_DIM), jnp.float32)
    cell0 = jax.random.normal(k_c, (N_LAYERS, BATCH, HIDDEN_DIM), jnp.float32)

    pred, hid, cel = decoder_forward(fused, tokens, cell0, hidden0)
    jax.block_until_ready((pred, hid, cel))

    # correctness check vs faithful pure-JAX reference
    pred_r, hid_r, cel_r = decoder_reference(raw, tokens, cell0, hidden0)
    np.testing.assert_allclose(np.asarray(pred), np.asarray(pred_r), rtol=1e-5, atol=1e-5)
    np.testing.assert_allclose(np.asarray(hid), np.asarray(hid_r), rtol=1e-5, atol=1e-5)
    np.testing.assert_allclose(np.asarray(cel), np.asarray(cel_r), rtol=1e-5, atol=1e-5)

    print("KERNEL_OK")
</pallas_src>

<mosaic_0001>
module attributes {stable_mosaic.version = 11 : i64} {
  func.func @_decoder_fused_kernel(%arg0: memref<4xi32, #tpu.memory_space<smem>>, %arg1: memref<16x32xf32, #tpu.memory_space<vmem>>, %arg2: memref<2x64x128xf32, #tpu.memory_space<vmem>>, %arg3: memref<2x1x128xf32, #tpu.memory_space<vmem>>, %arg4: memref<2x4x32xf32, #tpu.memory_space<vmem>>, %arg5: memref<2x4x32xf32, #tpu.memory_space<vmem>>, %arg6: memref<32x16xf32, #tpu.memory_space<vmem>>, %arg7: memref<1x16xf32, #tpu.memory_space<vmem>>, %arg8: memref<4x16xf32, #tpu.memory_space<vmem>>, %arg9: memref<2x4x32xf32, #tpu.memory_space<vmem>>, %arg10: memref<2x4x32xf32, #tpu.memory_space<vmem>>, %arg11: memref<4x32xf32, #tpu.memory_space<vmem>>) attributes {dimension_semantics = [], scalar_prefetch = 0 : i64, scratch_operands = 1 : i64, tpu.core_type = #tpu.core_type<tc>} {
    %c0 = arith.constant 0 : index
    %0 = memref.load %arg0[%c0] : memref<4xi32, #tpu.memory_space<smem>>
    %1 = arith.index_cast %0 : i32 to index
    %c0_0 = arith.constant 0 : index
    %2 = vector.load %arg1[%1, %c0_0] : memref<16x32xf32, #tpu.memory_space<vmem>>, vector<1x32xf32>
    %c0_1 = arith.constant 0 : index
    %c0_2 = arith.constant 0 : index
    %3 = vector.load %arg11[%c0_1, %c0_2] : memref<4x32xf32, #tpu.memory_space<vmem>>, vector<1x32xf32>
    tpu.vector_store %arg11[%c0_1, %c0_2], %2 {strides = array<i32>} : memref<4x32xf32, #tpu.memory_space<vmem>>, vector<1x32xf32>,
    %c1 = arith.constant 1 : index
    %4 = memref.load %arg0[%c1] : memref<4xi32, #tpu.memory_space<smem>>
    %5 = arith.index_cast %4 : i32 to index
    %c0_3 = arith.constant 0 : index
    %6 = vector.load %arg1[%5, %c0_3] : memref<16x32xf32, #tpu.memory_space<vmem>>, vector<1x32xf32>
    %c1_4 = arith.constant 1 : index
    %c0_5 = arith.constant 0 : index
    %7 = vector.load %arg11[%c1_4, %c0_5] : memref<4x32xf32, #tpu.memory_space<vmem>>, vector<1x32xf32>
    tpu.vector_store %arg11[%c1_4, %c0_5], %6 {strides = array<i32>} : memref<4x32xf32, #tpu.memory_space<vmem>>, vector<1x32xf32>,
    %c2 = arith.constant 2 : index
    %8 = memref.load %arg0[%c2] : memref<4xi32, #tpu.memory_space<smem>>
    %9 = arith.index_cast %8 : i32 to index
    %c0_6 = arith.constant 0 : index
    %10 = vector.load %arg1[%9, %c0_6] : memref<16x32xf32, #tpu.memory_space<vmem>>, vector<1x32xf32>
    %c2_7 = arith.constant 2 : index
    %c0_8 = arith.constant 0 : index
    %11 = vector.load %arg11[%c2_7, %c0_8] : memref<4x32xf32, #tpu.memory_space<vmem>>, vector<1x32xf32>
    tpu.vector_store %arg11[%c2_7, %c0_8], %10 {strides = array<i32>} : memref<4x32xf32, #tpu.memory_space<vmem>>, vector<1x32xf32>,
    %c3 = arith.constant 3 : index
    %12 = memref.load %arg0[%c3] : memref<4xi32, #tpu.memory_space<smem>>
    %13 = arith.index_cast %12 : i32 to index
    %c0_9 = arith.constant 0 : index
    %14 = vector.load %arg1[%13, %c0_9] : memref<16x32xf32, #tpu.memory_space<vmem>>, vector<1x32xf32>
    %c3_10 = arith.constant 3 : index
    %c0_11 = arith.constant 0 : index
    %15 = vector.load %arg11[%c3_10, %c0_11] : memref<4x32xf32, #tpu.memory_space<vmem>>, vector<1x32xf32>
    tpu.vector_store %arg11[%c3_10, %c0_11], %14 {strides = array<i32>} : memref<4x32xf32, #tpu.memory_space<vmem>>, vector<1x32xf32>,
    %c0_12 = arith.constant 0 : index
    %c0_13 = arith.constant 0 : index
    %16 = vector.load %arg11[%c0_12, %c0_13] : memref<4x32xf32, #tpu.memory_space<vmem>>, vector<4x32xf32>
    %c0_14 = arith.constant 0 : index
    %c0_15 = arith.constant 0 : index
    %c0_16 = arith.constant 0 : index
    %17 = vector.load %arg4[%c0_14, %c0_15, %c0_16] : memref<2x4x32xf32, #tpu.memory_space<vmem>>, vector<1x4x32xf32>
    %18 = vector.shape_cast %17 : vector<1x4x32xf32> to vector<4x32xf32>
    %19 = tpu.concatenate %16, %18 in 1 : vector<4x32xf32>, vector<4x32xf32> -> vector<4x64xf32>
    %c0_17 = arith.constant 0 : index
    %c0_18 = arith.constant 0 : index
    %c0_19 = arith.constant 0 : index
    %20 = vector.load %arg2[%c0_17, %c0_18, %c0_19] : memref<2x64x128xf32, #tpu.memory_space<vmem>>, vector<1x64x128xf32>
    %21 = vector.shape_cast %20 : vector<1x64x128xf32> to vector<64x128xf32>
    %cst = arith.constant dense<0.000000e+00> : vector<4x128xf32>
    %22 = tpu.matmul %19, %21, %cst {dimension_numbers = #tpu.dot_dimension_numbers<[1], [0], [0], [1], [0, 0, 1, 1], [], []>, precision = #tpu.contract_precision<fp32>} : vector<4x64xf32>, vector<64x128xf32>, vector<4x128xf32> -> vector<4x128xf32>
    %c0_20 = arith.constant 0 : index
    %c0_21 = arith.constant 0 : index
    %c0_22 = arith.constant 0 : index
    %23 = vector.load %arg3[%c0_20, %c0_21, %c0_22] : memref<2x1x128xf32, #tpu.memory_space<vmem>>, vector<1x1x128xf32>
    %24 = vector.shape_cast %23 : vector<1x1x128xf32> to vector<1x128xf32>
    %25 = vector.broadcast %24 : vector<1x128xf32> to vector<4x128xf32>
    %26 = arith.addf %22, %25 : vector<4x128xf32>
    %27 = vector.extract_strided_slice %26 {offsets = [0, 0], sizes = [4, 96], strides = [1, 1]} : vector<4x128xf32> to vector<4x96xf32>
    %28 = arith.negf %27 : vector<4x96xf32>
    %29 = math.exp %28 : vector<4x96xf32>
    %cst_23 = arith.constant 1.000000e+00 : f32
    %30 = vector.broadcast %cst_23 : f32 to vector<4x96xf32>
    %31 = arith.addf %30, %29 : vector<4x96xf32>
    %32 = arith.divf %30, %31 : vector<4x96xf32>
    %33 = vector.extract_strided_slice %32 {offsets = [0, 0], sizes = [4, 32], strides = [1, 1]} : vector<4x96xf32> to vector<4x32xf32>
    %34 = vector.extract_strided_slice %32 {offsets = [0, 32], sizes = [4, 32], strides = [1, 1]} : vector<4x96xf32> to vector<4x32xf32>
    %35 = vector.extract_strided_slice %32 {offsets = [0, 64], sizes = [4, 32], strides = [1, 1]} : vector<4x96xf32> to vector<4x32xf32>
    %36 = vector.extract_strided_slice %26 {offsets = [0, 96], sizes = [4, 32], strides = [1, 1]} : vector<4x128xf32> to vector<4x32xf32>
    %37 = math.tanh %36 : vector<4x32xf32>
    %c0_24 = arith.constant 0 : index
    %c0_25 = arith.constant 0 : index
    %c0_26 = arith.constant 0 : index
    %38 = vector.load %arg5[%c0_24, %c0_25, %c0_26] : memref<2x4x32xf32, #tpu.memory_space<vmem>>, vector<1x4x32xf32>
    %39 = vector.shape_cast %38 : vector<1x4x32xf32> to vector<4x32xf32>
    %40 = arith.mulf %34, %39 : vector<4x32xf32>
    %41 = arith.mulf %33, %37 : vector<4x32xf32>
    %42 = arith.addf %40, %41 : vector<4x32xf32>
    %43 = math.tanh %42 : vector<4x32xf32>
    %44 = arith.mulf %35, %43 : vector<4x32xf32>
    %c0_27 = arith.constant 0 : index
    %c0_28 = arith.constant 0 : index
    %c0_29 = arith.constant 0 : index
    %45 = vector.load %arg10[%c0_27, %c0_28, %c0_29] : memref<2x4x32xf32, #tpu.memory_space<vmem>>, vector<1x4x32xf32>
    %46 = vector.shape_cast %45 : vector<1x4x32xf32> to vector<4x32xf32>
    %47 = vector.shape_cast %42 : vector<4x32xf32> to vector<1x4x32xf32>
    tpu.vector_store %arg10[%c0_27, %c0_28, %c0_29], %47 {strides = array<i32>} : memref<2x4x32xf32, #tpu.memory_space<vmem>>, vector<1x4x32xf32>,
    %c0_30 = arith.constant 0 : index
    %c0_31 = arith.constant 0 : index
    %c0_32 = arith.constant 0 : index
    %48 = vector.load %arg9[%c0_30, %c0_31, %c0_32] : memref<2x4x32xf32, #tpu.memory_space<vmem>>, vector<1x4x32xf32>
    %49 = vector.shape_cast %48 : vector<1x4x32xf32> to vector<4x32xf32>
    %50 = vector.shape_cast %44 : vector<4x32xf32> to vector<1x4x32xf32>
    tpu.vector_store %arg9[%c0_30, %c0_31, %c0_32], %50 {strides = array<i32>} : memref<2x4x32xf32, #tpu.memory_space<vmem>>, vector<1x4x32xf32>,
    %c1_33 = arith.constant 1 : index
    %c0_34 = arith.constant 0 : index
    %c0_35 = arith.constant 0 : index
    %51 = vector.load %arg4[%c1_33, %c0_34, %c0_35] : memref<2x4x32xf32, #tpu.memory_space<vmem>>, vector<1x4x32xf32>
    %52 = vector.shape_cast %51 : vector<1x4x32xf32> to vector<4x32xf32>
    %53 = tpu.concatenate %44, %52 in 1 : vector<4x32xf32>, vector<4x32xf32> -> vector<4x64xf32>
    %c1_36 = arith.constant 1 : index
    %c0_37 = arith.constant 0 : index
    %c0_38 = arith.constant 0 : index
    %54 = vector.load %arg2[%c1_36, %c0_37, %c0_38] : memref<2x64x128xf32, #tpu.memory_space<vmem>>, vector<1x64x128xf32>
    %55 = vector.shape_cast %54 : vector<1x64x128xf32> to vector<64x128xf32>
    %cst_39 = arith.constant dense<0.000000e+00> : vector<4x128xf32>
    %56 = tpu.matmul %53, %55, %cst_39 {dimension_numbers = #tpu.dot_dimension_numbers<[1], [0], [0], [1], [0, 0, 1, 1], [], []>, precision = #tpu.contract_precision<fp32>} : vector<4x64xf32>, vector<64x128xf32>, vector<4x128xf32> -> vector<4x128xf32>
    %c1_40 = arith.constant 1 : index
    %c0_41 = arith.constant 0 : index
    %c0_42 = arith.constant 0 : index
    %57 = vector.load %arg3[%c1_40, %c0_41, %c0_42] : memref<2x1x128xf32, #tpu.memory_space<vmem>>, vector<1x1x128xf32>
    %58 = vector.shape_cast %57 : vector<1x1x128xf32> to vector<1x128xf32>
    %59 = vector.broadcast %58 : vector<1x128xf32> to vector<4x128xf32>
    %60 = arith.addf %56, %59 : vector<4x128xf32>
    %61 = vector.extract_strided_slice %60 {offsets = [0, 0], sizes = [4, 96], strides = [1, 1]} : vector<4x128xf32> to vector<4x96xf32>
    %62 = arith.negf %61 : vector<4x96xf32>
    %63 = math.exp %62 : vector<4x96xf32>
    %cst_43 = arith.constant 1.000000e+00 : f32
    %64 = vector.broadcast %cst_43 : f32 to vector<4x96xf32>
    %65 = arith.addf %64, %63 : vector<4x96xf32>
    %66 = arith.divf %64, %65 : vector<4x96xf32>
    %67 = vector.extract_strided_slice %66 {offsets = [0, 0], sizes = [4, 32], strides = [1, 1]} : vector<4x96xf32> to vector<4x32xf32>
    %68 = vector.extract_strided_slice %66 {offsets = [0, 32], sizes = [4, 32], strides = [1, 1]} : vector<4x96xf32> to vector<4x32xf32>
    %69 = vector.extract_strided_slice %66 {offsets = [0, 64], sizes = [4, 32], strides = [1, 1]} : vector<4x96xf32> to vector<4x32xf32>
    %70 = vector.extract_strided_slice %60 {offsets = [0, 96], sizes = [4, 32], strides = [1, 1]} : vector<4x128xf32> to vector<4x32xf32>
    %71 = math.tanh %70 : vector<4x32xf32>
    %c1_44 = arith.constant 1 : index
    %c0_45 = arith.constant 0 : index
    %c0_46 = arith.constant 0 : index
    %72 = vector.load %arg5[%c1_44, %c0_45, %c0_46] : memref<2x4x32xf32, #tpu.memory_space<vmem>>, vector<1x4x32xf32>
    %73 = vector.shape_cast %72 : vector<1x4x32xf32> to vector<4x32xf32>
    %74 = arith.mulf %68, %73 : vector<4x32xf32>
    %75 = arith.mulf %67, %71 : vector<4x32xf32>
    %76 = arith.addf %74, %75 : vector<4x32xf32>
    %77 = math.tanh %76 : vector<4x32xf32>
    %78 = arith.mulf %69, %77 : vector<4x32xf32>
    %c1_47 = arith.constant 1 : index
    %c0_48 = arith.constant 0 : index
    %c0_49 = arith.constant 0 : index
    %79 = vector.load %arg10[%c1_47, %c0_48, %c0_49] : memref<2x4x32xf32, #tpu.memory_space<vmem>>, vector<1x4x32xf32>
    %80 = vector.shape_cast %79 : vector<1x4x32xf32> to vector<4x32xf32>
    %81 = vector.shape_cast %76 : vector<4x32xf32> to vector<1x4x32xf32>
    tpu.vector_store %arg10[%c1_47, %c0_48, %c0_49], %81 {strides = array<i32>} : memref<2x4x32xf32, #tpu.memory_space<vmem>>, vector<1x4x32xf32>,
    %c1_50 = arith.constant 1 : index
    %c0_51 = arith.constant 0 : index
    %c0_52 = arith.constant 0 : index
    %82 = vector.load %arg9[%c1_50, %c0_51, %c0_52] : memref<2x4x32xf32, #tpu.memory_space<vmem>>, vector<1x4x32xf32>
    %83 = vector.shape_cast %82 : vector<1x4x32xf32> to vector<4x32xf32>
    %84 = vector.shape_cast %78 : vector<4x32xf32> to vector<1x4x32xf32>
    tpu.vector_store %arg9[%c1_50, %c0_51, %c0_52], %84 {strides = array<i32>} : memref<2x4x32xf32, #tpu.memory_space<vmem>>, vector<1x4x32xf32>,
    %c0_53 = arith.constant 0 : index
    %c0_54 = arith.constant 0 : index
    %85 = vector.load %arg6[%c0_53, %c0_54] : memref<32x16xf32, #tpu.memory_space<vmem>>, vector<32x16xf32>
    %cst_55 = arith.constant dense<0.000000e+00> : vector<4x16xf32>
    %86 = tpu.matmul %78, %85, %cst_55 {dimension_numbers = #tpu.dot_dimension_numbers<[1], [0], [0], [1], [0, 0, 1, 1], [], []>, precision = #tpu.contract_precision<fp32>} : vector<4x32xf32>, vector<32x16xf32>, vector<4x16xf32> -> vector<4x16xf32>
    %c0_56 = arith.constant 0 : index
    %c0_57 = arith.constant 0 : index
    %87 = vector.load %arg7[%c0_56, %c0_57] : memref<1x16xf32, #tpu.memory_space<vmem>>, vector<1x16xf32>
    %88 = vector.broadcast %87 : vector<1x16xf32> to vector<4x16xf32>
    %89 = arith.addf %86, %88 : vector<4x16xf32>
    %c0_58 = arith.constant 0 : index
    %c0_59 = arith.constant 0 : index
    %90 = vector.load %arg8[%c0_58, %c0_59] : memref<4x16xf32, #tpu.memory_space<vmem>>, vector<4x16xf32>
    tpu.vector_store %arg8[%c0_58, %c0_59], %89 {strides = array<i32>} : memref<4x16xf32, #tpu.memory_space<vmem>>, vector<4x16xf32>,
    return
  }
}

</mosaic_0001>

<llo_original>
// kernel: decoder_forward.1
$region0: #{decoder_forward.1}
  #allocation0 [shape = 'u32[]', space=smem, size = 0x4, offset = 0x4, fixed_abs, tag = 'smem constant byte address 0x4 - core index']
  #allocation1 [shape = 'u32[144,128]{1,0:T(1,128)}', space=vmem, size = 0x12000, scoped, tag = 'internal scratch']
  #allocation2 [shape = 'f32[4,32]{1,0:T(4,128)}', space=vmem, size = 0x800, scoped, tag = 'scratch operand']
  %s0 = inlined_call_operand.vmem [shape: s32[4], index: 0, kind: input, shape index: {}]
  %s1 = inlined_call_operand.vmem [shape: f32[16,32], index: 1, kind: input, shape index: {}]
  %s2 = inlined_call_operand.hbm [shape: f32[2,64,128], index: 2, kind: input, shape index: {}]
  %s3 = inlined_call_operand.vmem [shape: f32[2,1,128], index: 3, kind: input, shape index: {}]
  %s4 = inlined_call_operand.vmem [shape: f32[2,4,32], index: 4, kind: input, shape index: {}]
  %s5 = inlined_call_operand.vmem [shape: f32[2,4,32], index: 5, kind: input, shape index: {}]
  %s6 = inlined_call_operand.vmem [shape: f32[32,16], index: 6, kind: input, shape index: {}]
  %s7 = inlined_call_operand.vmem [shape: f32[1,16], index: 7, kind: input, shape index: {}]
  %s8 = inlined_call_operand.hbm [shape: f32[4,16], index: 8, kind: output, shape index: {0}]
  %s9 = inlined_call_operand.hbm [shape: f32[2,4,32], index: 9, kind: output, shape index: {1}]
  %s10 = inlined_call_operand.hbm [shape: f32[2,4,32], index: 10, kind: output, shape index: {2}]
  %11 = xla_tuple %s8, %s9, %s10
  %s12 = sld [smem:[#allocation0]]
  $region66: #{decoder_forward.1} parent=0
    _
  %s14 = ssub.s32 1, %s12
  %s15 = scalar_select 0, %s14, %s12
  $region1: #{decoder_forward.1} parent=0
    #allocation3 [shape = 'u8[512]{0}', space=smem, size = 0x200, scoped, tag = 'input window, operand 0, single buffered']
    #allocation4 [shape = 's32[1]{0}', space=sflag, size = 0x4, scoped, tag = 'scoped memory for decoder_forward.1']
    #allocation5 [shape = 's32[1]{0}', space=sflag, size = 0x4, scoped, tag = 'scoped memory for decoder_forward.1']
    #allocation6 [shape = 's32[1]{0}', space=sflag, size = 0x4, scoped, tag = 'scoped memory for decoder_forward.1']
    #allocation7 [shape = 'u8[65536]{0}', space=vmem, size = 0x10000, scoped, tag = 'input window, operand 2, single buffered']
    #allocation8 [shape = 'u8[2048]{0}', space=vmem, size = 0x800, scoped, tag = 'output window, operand 0, single buffered']
    #allocation9 [shape = 'u8[4096]{0}', space=vmem, size = 0x1000, scoped, tag = 'output window, operand 1, single buffered']
    #allocation10 [shape = 's32[1]{0}', space=sflag, size = 0x4, scoped, tag = 'scoped memory for decoder_forward.1']
    #allocation11 [shape = 'u8[4096]{0}', space=vmem, size = 0x1000, scoped, tag = 'output window, operand 2, single buffered']
    %16 = vsyncpa [#allocation6], 0
    %17 = vsyncpa [#allocation4], 0
    %18 = vsyncpa [#allocation5], 0
    %19 = vsyncpa [#allocation10], 0
    // Predicated region
    $region2: #{decoder_forward.1} parent=1 // pred_check
      _
    $region3: #{decoder_forward.1} parent=1 // pred_check_branch
      %21 = sbr.rel (0) target = $region5
    $region4: #{decoder_forward.1} parent=1 // pred_region
      %s23 = ssub.s32 16, 16
      %24 = vsyncadd [#allocation6], %s23
      %s26 = sshll.u32 %s0, 4
      %s27 = int_to_ptr.vmem [resolvable:$true] %s26
      %29 = dma.vmem_to_smem %s27, 16, [#allocation3], [#allocation6]
    $region5: #{decoder_forward.1} parent=1 // pred_fallthru
      _
    // Predicated region
    $region6: #{decoder_forward.1} parent=1 // pred_check
      _
    $region7: #{decoder_forward.1} parent=1 // pred_check_branch
      %31 = sbr.rel (0) target = $region9
    $region8: #{decoder_forward.1} parent=1 // pred_region
      _
    $region9: #{decoder_forward.1} parent=1 // pred_fallthru
      _
    // Predicated region
    $region10: #{decoder_forward.1} parent=1 // pred_check
      _
    $region11: #{decoder_forward.1} parent=1 // pred_check_branch
      %33 = sbr.rel (0) target = $region13
    $region12: #{decoder_forward.1} parent=1 // pred_region
      %s35 = ssub.s32 2048, 2048
      %36 = vsyncadd [#allocation4], %s35
      %s37 = sshll.u32 [#allocation7], 4
      %s38 = int_to_ptr.vmem [resolvable:$true] %s37
      %43 = dma.hbm_to_vmem [thread:$0]  %s2, 2048, %s38, [#allocation4], 128, 128, 8
    $region13: #{decoder_forward.1} parent=1 // pred_fallthru
      _
    // Predicated region
    $region14: #{decoder_forward.1} parent=1 // pred_check
      _
    $region15: #{decoder_forward.1} parent=1 // pred_check_branch
      %45 = sbr.rel (0) target = $region17
    $region16: #{decoder_forward.1} parent=1 // pred_region
      _
    $region17: #{decoder_forward.1} parent=1 // pred_fallthru
      _
    // Predicated region
    $region18: #{decoder_forward.1} parent=1 // pred_check
      _
    $region19: #{decoder_forward.1} parent=1 // pred_check_branch
      %47 = sbr.rel (0) target = $region21
    $region20: #{decoder_forward.1} parent=1 // pred_region
      _
    $region21: #{decoder_forward.1} parent=1 // pred_fallthru
      _
    // Predicated region
    $region22: #{decoder_forward.1} parent=1 // pred_check
      _
    $region23: #{decoder_forward.1} parent=1 // pred_check_branch
      %49 = sbr.rel (0) target = $region25
    $region24: #{decoder_forward.1} parent=1 // pred_region
      _
    $region25: #{decoder_forward.1} parent=1 // pred_fallthru
      _
    // Predicated region
    $region26: #{decoder_forward.1} parent=1 // pred_check
      _
    $region27: #{decoder_forward.1} parent=1 // pred_check_branch
      %51 = sbr.rel (0) target = $region29
    $region28: #{decoder_forward.1} parent=1 // pred_region
      _
    $region29: #{decoder_forward.1} parent=1 // pred_fallthru
      _
    // Predicated region
    $region30: #{decoder_forward.1} parent=1 // pred_check
      _
    $region31: #{decoder_forward.1} parent=1 // pred_check_branch
      %53 = sbr.rel (0) target = $region33
    $region32: #{decoder_forward.1} parent=1 // pred_region
      _
    $region33: #{decoder_forward.1} parent=1 // pred_fallthru
      _
    // Predicated region
    $region34: #{decoder_forward.1} parent=1 // pred_check
      _
    $region35: #{decoder_forward.1} parent=1 // pred_check_branch
      %55 = sbr.rel (0) target = $region37
    $region36: #{decoder_forward.1} parent=1 // pred_region
      %56 = dma.done [#allocation6], 16
    $region37: #{decoder_forward.1} parent=1 // pred_fallthru
      _
    // Predicated region
    $region38: #{decoder_forward.1} parent=1 // pred_check
      _
    $region39: #{decoder_forward.1} parent=1 // pred_check_branch
      %58 = sbr.rel (0) target = $region41
    $region40: #{decoder_forward.1} parent=1 // pred_region
      %59 = dma.done [#allocation4], 2048
    $region41: #{decoder_forward.1} parent=1 // pred_fallthru
      _
    %60 = sfence
    %s61 = sld [smem:[#allocation3]]
    %s62 = scalar_lea.vmem %s1, %s61
    %v63 = vld [vmem:[%s62] sm:$0x1]
    %vm64 = vcmask 253952
    %65 = vst.msk [vmem:[#allocation2] sm:$0x1] %vm64, %v63
    %s66 = sld [smem:[#allocation3 + $0x1]]
    %s67 = scalar_lea.vmem %s1, %s66
    %v68 = vld [vmem:[%s67] sm:$0x1]
    %69 = vst.msk [vmem:[#allocation2 + $0x1] sm:$0x1] %vm64, %v68
    %s70 = sld [smem:[#allocation3 + $0x2]]
    %s71 = scalar_lea.vmem %s1, %s70
    %v72 = vld [vmem:[%s71] sm:$0x1]
    %73 = vst.msk [vmem:[#allocation2 + $0x2] sm:$0x1] %vm64, %v72
    %s74 = sld [smem:[#allocation3 + $0x3]]
    %s75 = scalar_lea.vmem %s1, %s74
    %v76 = vld [vmem:[%s75] sm:$0x1]
    %77 = vst.msk [vmem:[#allocation2 + $0x3] sm:$0x1] %vm64, %v76
    %v78 = vld [vmem:[#allocation2] sm:$0xf]
    %v79 = vld [vmem:[%s4] sm:$0xf]
    %81 = vrot.lane.b32.xlu0 %v79, 32
    %v82 = vpop.permute.xlu0 %81
    %vm84 = vcmask 261120
    %v85 = vsel %vm84, %v78, %v82
    %v86 = vld [vmem:[#allocation7] sm:$0xff]
    %v87 = vld [vmem:[#allocation7 + $0x8] sm:$0xff]
    %v88 = vld [vmem:[#allocation7 + $0x10] sm:$0xff]
    %v89 = vld [vmem:[#allocation7 + $0x18] sm:$0xff]
    %v90 = vld [vmem:[#allocation7 + $0x20] sm:$0xff]
    %v91 = vld [vmem:[#allocation7 + $0x28] sm:$0xff]
    %v92 = vld [vmem:[#allocation7 + $0x30] sm:$0xff]
    %v93 = vld [vmem:[#allocation7 + $0x38] sm:$0xff]
    %v94 = vld [vmem:[%s3] sm:$0x1]
    %v96 = vlaneseq
    %v97 = vshrl.u32 %v96, 7
    %v98 = vsub.s32 0, %v97
    %v99 = vrot.slane %v94, %v98
    %vm101 = vcmask 523264
    %v103 = vsel %vm101, %v85, 0
    %105 = vmatprep.subr.mxu0 0.0
    %v106 = vand.u32 %v86, 4294901760
    %107 = vmatpush1.msra.mxu0 %v106
    %108 = vmatprep.subr.mxu0 0.0
    %v109 = vand.u32 %v87, 4294901760
    %110 = vmatpush1.msra.mxu0 %v109
    %111 = vmatprep.subr.mxu0 0.0
    %v112 = vand.u32 %v88, 4294901760
    %113 = vmatpush1.msra.mxu0 %v112
    %114 = vmatprep.subr.mxu0 0.0
    %v115 = vand.u32 %v89, 4294901760
    %116 = vmatpush1.msra.mxu0 %v115
    %117 = vmatprep.subr.mxu0 0.0
    %v118 = vand.u32 %v90, 4294901760
    %119 = vmatpush1.msra.mxu0 %v118
    %120 = vmatprep.subr.mxu0 0.0
    %v121 = vand.u32 %v91, 4294901760
    %122 = vmatpush1.msra.mxu0 %v121
    %123 = vmatprep.subr.mxu0 0.0
    %v124 = vand.u32 %v92, 4294901760
    %125 = vmatpush1.msra.mxu0 %v124
    %126 = vmatprep.subr.mxu0 0.0
    %v127 = vand.u32 %v93, 4294901760
    %128 = vmatpush1.msra.mxu0 %v127
    %129 = vmatprep.subr.mxu0 0.0
    %130 = vmatpush1.msra.mxu0 0.0
    %131 = vmatprep.subr.mxu0 0.0
    %132 = vmatpush1.msra.mxu0 0.0
    %133 = vmatprep.subr.mxu0 0.0
    %134 = vmatpush1.msra.mxu0 0.0
    %135 = vmatprep.subr.mxu0 0.0
    %136 = vmatpush1.msra.mxu0 0.0
    %137 = vmatprep.subr.mxu0 0.0
    %138 = vmatpush1.msra.mxu0 0.0
    %139 = vmatprep.subr.mxu0 0.0
    %140 = vmatpush1.msra.mxu0 0.0
    %141 = vmatprep.subr.mxu0 0.0
    %142 = vmatpush1.msra.mxu0 0.0
    %143 = vmatprep.subr.mxu0 0.0
    %144 = vmatpush1.msra.mxu0 0.0
    %145 = vmatprep.subr.mxu0 0.0
    %146 = vmatpush1.msra.mxu0 0.0
    %147 = vmatprep.subr.mxu0 0.0
    %148 = vmatpush1.msra.mxu0 0.0
    %149 = vmatprep.subr.mxu0 0.0
    %150 = vmatpush1.msra.mxu0 0.0
    %151 = vmatprep.subr.mxu0 0.0
    %152 = vmatpush1.msra.mxu0 0.0
    %153 = vmatprep.subr.mxu0 0.0
    %154 = vmatpush1.msra.mxu0 0.0
    %155 = vmatprep.subr.mxu0 0.0
    %156 = vmatpush1.msra.mxu0 0.0
    %157 = vmatprep.subr.mxu0 0.0
    %158 = vmatpush1.msra.mxu0 0.0
    %159 = vmatprep.subr.mxu0 0.0
    %160 = vmatpush1.msra.mxu0 0.0
    %161 = vmatprep.subr.mxu0 0.0
    %162 = vmatpush1.msra.mxu0 0.0
    %163 = vmatprep.subr.mxu0 0.0
    %164 = vmatpush1.msra.mxu0 0.0
    %165 = vmatprep.subr.mxu0 0.0
    %166 = vmatpush1.msra.mxu0 0.0
    %167 = vmatprep.subr.mxu0 0.0
    %168 = vmatpush1.msra.mxu0 0.0
    %169 = vmatprep.subr.mxu0 0.0
    %170 = vmatpush1.msra.mxu0 0.0
    %171 = vmatprep.subr.mxu0 0.0
    %172 = vmatpush1.msra.mxu0 0.0
    %173 = vmatprep.subr.mxu0 0.0
    %174 = vmatpush1.msra.mxu0 0.0
    %175 = vmatprep.subr.mxu0 0.0
    %176 = vmatpush1.msra.mxu0 0.0
    %177 = vmatprep.mubr.f32.mxu0 0.0
    %v178 = vand.u32 %v103, 4294901760
    %v179 = vsub.f32 %v103, %v178
    %v180 = vand.u32 %v179, 4294901760
    %v181 = vsub.f32 %v179, %v180
    %v182 = vand.u32 %v181, 4294901760
    %183 = vmatmul.mubr.f32.gmra.mrb[0].mxu0 %v182
    %v184 = vpop.f32.mrb[0].mxu0
    %v185 = vadd.f32 %v99, %v184
    %v186 = vpop.f32.mrb[0].mxu0
    %187 = vdwg.mxu0
    %188 = vmatprep.subr.mxu0 0.0
    %v189 = vand.u32 %v86, 4294901760
    %v190 = vsub.f32 %v86, %v189
    %v191 = vand.u32 %v190, 4294901760
    %v192 = vsub.f32 %v190, %v191
    %v193 = vand.u32 %v192, 4294901760
    %194 = vmatpush1.msra.mxu0 %v193
    %195 = vmatprep.subr.mxu0 0.0
    %v196 = vand.u32 %v87, 4294901760
    %v197 = vsub.f32 %v87, %v196
    %v198 = vand.u32 %v197, 4294901760
    %v199 = vsub.f32 %v197, %v198
    %v200 = vand.u32 %v199, 4294901760
    %201 = vmatpush1.msra.mxu0 %v200
    %202 = vmatprep.subr.mxu0 0.0
    %v203 = vand.u32 %v88, 4294901760
    %v204 = vsub.f32 %v88, %v203
    %v205 = vand.u32 %v204, 4294901760
    %v206 = vsub.f32 %v204, %v205
    %v207 = vand.u32 %v206, 4294901760
    %208 = vmatpush1.msra.mxu0 %v207
    %209 = vmatprep.subr.mxu0 0.0
    %v210 = vand.u32 %v89, 4294901760
    %v211 = vsub.f32 %v89, %v210
    %v212 = vand.u32 %v211, 4294901760
    %v213 = vsub.f32 %v211, %v212
    %v214 = vand.u32 %v213, 4294901760
    %215 = vmatpush1.msra.mxu0 %v214
    %216 = vmatprep.subr.mxu0 0.0
    %v217 = vand.u32 %v90, 4294901760
    %v218 = vsub.f32 %v90, %v217
    %v219 = vand.u32 %v218, 4294901760
    %v220 = vsub.f32 %v218, %v219
    %v221 = vand.u32 %v220, 4294901760
    %222 = vmatpush1.msra.mxu0 %v221
    %223 = vmatprep.subr.mxu0 0.0
    %v224 = vand.u32 %v91, 4294901760
    %v225 = vsub.f32 %v91, %v224
    %v226 = vand.u32 %v225, 4294901760
    %v227 = vsub.f32 %v225, %v226
    %v228 = vand.u32 %v227, 4294901760
    %229 = vmatpush1.msra.mxu0 %v228
    %230 = vmatprep.subr.mxu0 0.0
    %v231 = vand.u32 %v92, 4294901760
    %v232 = vsub.f32 %v92, %v231
    %v233 = vand.u32 %v232, 4294901760
    %v234 = vsub.f32 %v232, %v233
    %v235 = vand.u32 %v234, 4294901760
    %236 = vmatpush1.msra.mxu0 %v235
    %237 = vmatprep.subr.mxu0 0.0
    %v238 = vand.u32 %v93, 4294901760
    %v239 = vsub.f32 %v93, %v238
    %v240 = vand.u32 %v239, 4294901760
    %v241 = vsub.f32 %v239, %v240
    %v242 = vand.u32 %v241, 4294901760
    %243 = vmatpush1.msra.mxu0 %v242
    %244 = vmatprep.subr.mxu0 0.0
    %245 = vmatpush1.msra.mxu0 0.0
    %246 = vmatprep.subr.mxu0 0.0
    %247 = vmatpush1.msra.mxu0 0.0
    %248 = vmatprep.subr.mxu0 0.0
    %249 = vmatpush1.msra.mxu0 0.0
    %250 = vmatprep.subr.mxu0 0.0
    %251 = vmatpush1.msra.mxu0 0.0
    %252 = vmatprep.subr.mxu0 0.0
    %253 = vmatpush1.msra.mxu0 0.0
    %254 = vmatprep.subr.mxu0 0.0
    %255 = vmatpush1.msra.mxu0 0.0
    %256 = vmatprep.subr.mxu0 0.0
    %257 = vmatpush1.msra.mxu0 0.0
    %258 = vmatprep.subr.mxu0 0.0
    %259 = vmatpush1.msra.mxu0 0.0
    %260 = vmatprep.subr.mxu0 0.0
    %261 = vmatpush1.msra.mxu0 0.0
    %262 = vmatprep.subr.mxu0 0.0
    %263 = vmatpush1.msra.mxu0 0.0
    %264 = vmatprep.subr.mxu0 0.0
    %265 = vmatpush1.msra.mxu0 0.0
    %266 = vmatprep.subr.mxu0 0.0
    %267 = vmatpush1.msra.mxu0 0.0
    %268 = vmatprep.subr.mxu0 0.0
    %269 = vmatpush1.msra.mxu0 0.0
    %270 = vmatprep.subr.mxu0 0.0
    %271 = vmatpush1.msra.mxu0 0.0
    %272 = vmatprep.subr.mxu0 0.0
    %273 = vmatpush1.msra.mxu0 0.0
    %274 = vmatprep.subr.mxu0 0.0
    %275 = vmatpush1.msra.mxu0 0.0
    %276 = vmatprep.subr.mxu0 0.0
    %277 = vmatpush1.msra.mxu0 0.0
    %278 = vmatprep.subr.mxu0 0.0
    %279 = vmatpush1.msra.mxu0 0.0
    %280 = vmatprep.subr.mxu0 0.0
    %281 = vmatpush1.msra.mxu0 0.0
    %282 = vmatprep.subr.mxu0 0.0
    %283 = vmatpush1.msra.mxu0 0.0
    %284 = vmatprep.subr.mxu0 0.0
    %285 = vmatpush1.msra.mxu0 0.0
    %286 = vmatprep.subr.mxu0 0.0
    %287 = vmatpush1.msra.mxu0 0.0
    %288 = vmatprep.subr.mxu0 0.0
    %289 = vmatpush1.msra.mxu0 0.0
    %290 = vmatprep.subr.mxu0 0.0
    %291 = vmatpush1.msra.mxu0 0.0
    %292 = vmatprep.mubr.f32.mxu0 0.0
    %v293 = vand.u32 %v103, 4294901760
    %294 = vmatmul.mubr.f32.gmra.mrb[0].mxu0 %v293
    %v295 = vpop.f32.mrb[0].mxu0
    %v296 = vadd.f32 %v185, %v295
    %v297 = vpop.f32.mrb[0].mxu0
    %298 = vdwg.mxu0
    %299 = vmatprep.subr.mxu0 0.0
    %v300 = vand.u32 %v86, 4294901760
    %v301 = vsub.f32 %v86, %v300
    %302 = vmatpush1.msra.mxu0 %v301
    %303 = vmatprep.subr.mxu0 0.0
    %v304 = vand.u32 %v87, 4294901760
    %v305 = vsub.f32 %v87, %v304
    %306 = vmatpush1.msra.mxu0 %v305
    %307 = vmatprep.subr.mxu0 0.0
    %v308 = vand.u32 %v88, 4294901760
    %v309 = vsub.f32 %v88, %v308
    %310 = vmatpush1.msra.mxu0 %v309
    %311 = vmatprep.subr.mxu0 0.0
    %v312 = vand.u32 %v89, 4294901760
    %v313 = vsub.f32 %v89, %v312
    %314 = vmatpush1.msra.mxu0 %v313
    %315 = vmatprep.subr.mxu0 0.0
    %v316 = vand.u32 %v90, 4294901760
    %v317 = vsub.f32 %v90, %v316
    %318 = vmatpush1.msra.mxu0 %v317
    %319 = vmatprep.subr.mxu0 0.0
    %v320 = vand.u32 %v91, 4294901760
    %v321 = vsub.f32 %v91, %v320
    %322 = vmatpush1.msra.mxu0 %v321
    %323 = vmatprep.subr.mxu0 0.0
    %v324 = vand.u32 %v92, 4294901760
    %v325 = vsub.f32 %v92, %v324
    %326 = vmatpush1.msra.mxu0 %v325
    %327 = vmatprep.subr.mxu0 0.0
    %v328 = vand.u32 %v93, 4294901760
    %v329 = vsub.f32 %v93, %v328
    %330 = vmatpush1.msra.mxu0 %v329
    %331 = vmatprep.subr.mxu0 0.0
    %332 = vmatpush1.msra.mxu0 0.0
    %333 = vmatprep.subr.mxu0 0.0
    %334 = vmatpush1.msra.mxu0 0.0
    %335 = vmatprep.subr.mxu0 0.0
    %336 = vmatpush1.msra.mxu0 0.0
    %337 = vmatprep.subr.mxu0 0.0
    %338 = vmatpush1.msra.mxu0 0.0
    %339 = vmatprep.subr.mxu0 0.0
    %340 = vmatpush1.msra.mxu0 0.0
    %341 = vmatprep.subr.mxu0 0.0
    %342 = vmatpush1.msra.mxu0 0.0
    %343 = vmatprep.subr.mxu0 0.0
    %344 = vmatpush1.msra.mxu0 0.0
    %345 = vmatprep.subr.mxu0 0.0
    %346 = vmatpush1.msra.mxu0 0.0
    %347 = vmatprep.subr.mxu0 0.0
    %348 = vmatpush1.msra.mxu0 0.0
    %349 = vmatprep.subr.mxu0 0.0
    %350 = vmatpush1.msra.mxu0 0.0
    %351 = vmatprep.subr.mxu0 0.0
    %352 = vmatpush1.msra.mxu0 0.0
    %353 = vmatprep.subr.mxu0 0.0
    %354 = vmatpush1.msra.mxu0 0.0
    %355 = vmatprep.subr.mxu0 0.0
    %356 = vmatpush1.msra.mxu0 0.0
    %357 = vmatprep.subr.mxu0 0.0
    %358 = vmatpush1.msra.mxu0 0.0
    %359 = vmatprep.subr.mxu0 0.0
    %360 = vmatpush1.msra.mxu0 0.0
    %361 = vmatprep.subr.mxu0 0.0
    %362 = vmatpush1.msra.mxu0 0.0
    %363 = vmatprep.subr.mxu0 0.0
    %364 = vmatpush1.msra.mxu0 0.0
    %365 = vmatprep.subr.mxu0 0.0
    %366 = vmatpush1.msra.mxu0 0.0
    %367 = vmatprep.subr.mxu0 0.0
    %368 = vmatpush1.msra.mxu0 0.0
    %369 = vmatprep.subr.mxu0 0.0
    %370 = vmatpush1.msra.mxu0 0.0
    %371 = vmatprep.subr.mxu0 0.0
    %372 = vmatpush1.msra.mxu0 0.0
    %373 = vmatprep.subr.mxu0 0.0
    %374 = vmatpush1.msra.mxu0 0.0
    %375 = vmatprep.subr.mxu0 0.0
    %376 = vmatpush1.msra.mxu0 0.0
    %377 = vmatprep.subr.mxu0 0.0
    %378 = vmatpush1.msra.mxu0 0.0
    %379 = vmatprep.mubr.f32.mxu0 0.0
    %v380 = vand.u32 %v103, 4294901760
    %v381 = vsub.f32 %v103, %v380
    %382 = vmatmul.mubr.f32.gmra.mrb[0].mxu0 %v381
    %v383 = vpop.f32.mrb[0].mxu0
    %v384 = vadd.f32 %v296, %v383
    %v385 = vpop.f32.mrb[0].mxu0
    %386 = vdwg.mxu0
    %387 = vmatprep.subr.mxu0 0.0
    %v388 = vand.u32 %v86, 4294901760
    %389 = vmatpush1.msra.mxu0 %v388
    %390 = vmatprep.subr.mxu0 0.0
    %v391 = vand.u32 %v87, 4294901760
    %392 = vmatpush1.msra.mxu0 %v391
    %393 = vmatprep.subr.mxu0 0.0
    %v394 = vand.u32 %v88, 4294901760
    %395 = vmatpush1.msra.mxu0 %v394
    %396 = vmatprep.subr.mxu0 0.0
    %v397 = vand.u32 %v89, 4294901760
    %398 = vmatpush1.msra.mxu0 %v397
    %399 = vmatprep.subr.mxu0 0.0
    %v400 = vand.u32 %v90, 4294901760
    %401 = vmatpush1.msra.mxu0 %v400
    %402 = vmatprep.subr.mxu0 0.0
    %v403 = vand.u32 %v91, 4294901760
    %404 = vmatpush1.msra.mxu0 %v403
    %405 = vmatprep.subr.mxu0 0.0
    %v406 = vand.u32 %v92, 4294901760
    %407 = vmatpush1.msra.mxu0 %v406
    %408 = vmatprep.subr.mxu0 0.0
    %v409 = vand.u32 %v93, 4294901760
    %410 = vmatpush1.msra.mxu0 %v409
    %411 = vmatprep.subr.mxu0 0.0
    %412 = vmatpush1.msra.mxu0 0.0
    %413 = vmatprep.subr.mxu0 0.0
    %414 = vmatpush1.msra.mxu0 0.0
    %415 = vmatprep.subr.mxu0 0.0
    %416 = vmatpush1.msra.mxu0 0.0
    %417 = vmatprep.subr.mxu0 0.0
    %418 = vmatpush1.msra.mxu0 0.0
    %419 = vmatprep.subr.mxu0 0.0
    %420 = vmatpush1.msra.mxu0 0.0
    %421 = vmatprep.subr.mxu0 0.0
    %422 = vmatpush1.msra.mxu0 0.0
    %423 = vmatprep.subr.mxu0 0.0
    %424 = vmatpush1.msra.mxu0 0.0
    %425 = vmatprep.subr.mxu0 0.0
    %426 = vmatpush1.msra.mxu0 0.0
    %427 = vmatprep.subr.mxu0 0.0
    %428 = vmatpush1.msra.mxu0 0.0
    %429 = vmatprep.subr.mxu0 0.0
    %430 = vmatpush1.msra.mxu0 0.0
    %431 = vmatprep.subr.mxu0 0.0
    %432 = vmatpush1.msra.mxu0 0.0
    %433 = vmatprep.subr.mxu0 0.0
    %434 = vmatpush1.msra.mxu0 0.0
    %435 = vmatprep.subr.mxu0 0.0
    %436 = vmatpush1.msra.mxu0 0.0
    %437 = vmatprep.subr.mxu0 0.0
    %438 = vmatpush1.msra.mxu0 0.0
    %439 = vmatprep.subr.mxu0 0.0
    %440 = vmatpush1.msra.mxu0 0.0
    %441 = vmatprep.subr.mxu0 0.0
    %442 = vmatpush1.msra.mxu0 0.0
    %443 = vmatprep.subr.mxu0 0.0
    %444 = vmatpush1.msra.mxu0 0.0
    %445 = vmatprep.subr.mxu0 0.0
    %446 = vmatpush1.msra.mxu0 0.0
    %447 = vmatprep.subr.mxu0 0.0
    %448 = vmatpush1.msra.mxu0 0.0
    %449 = vmatprep.subr.mxu0 0.0
    %450 = vmatpush1.msra.mxu0 0.0
    %451 = vmatprep.subr.mxu0 0.0
    %452 = vmatpush1.msra.mxu0 0.0
    %453 = vmatprep.subr.mxu0 0.0
    %454 = vmatpush1.msra.mxu0 0.0
    %455 = vmatprep.subr.mxu0 0.0
    %456 = vmatpush1.msra.mxu0 0.0
    %457 = vmatprep.subr.mxu0 0.0
    %458 = vmatpush1.msra.mxu0 0.0
    %459 = vmatprep.mubr.f32.mxu0 0.0
    %v460 = vand.u32 %v103, 4294901760
    %v461 = vsub.f32 %v103, %v460
    %v462 = vand.u32 %v461, 4294901760
    %463 = vmatmul.mubr.f32.gmra.mrb[0].mxu0 %v462
    %v464 = vpop.f32.mrb[0].mxu0
    %v465 = vadd.f32 %v384, %v464
    %v466 = vpop.f32.mrb[0].mxu0
    %467 = vdwg.mxu0
    %468 = vmatprep.subr.mxu0 0.0
    %v469 = vand.u32 %v86, 4294901760
    %v470 = vsub.f32 %v86, %v469
    %v471 = vand.u32 %v470, 4294901760
    %472 = vmatpush1.msra.mxu0 %v471
    %473 = vmatprep.subr.mxu0 0.0
    %v474 = vand.u32 %v87, 4294901760
    %v475 = vsub.f32 %v87, %v474
    %v476 = vand.u32 %v475, 4294901760
    %477 = vmatpush1.msra.mxu0 %v476
    %478 = vmatprep.subr.mxu0 0.0
    %v479 = vand.u32 %v88, 4294901760
    %v480 = vsub.f32 %v88, %v479
    %v481 = vand.u32 %v480, 4294901760
    %482 = vmatpush1.msra.mxu0 %v481
    %483 = vmatprep.subr.mxu0 0.0
    %v484 = vand.u32 %v89, 4294901760
    %v485 = vsub.f32 %v89, %v484
    %v486 = vand.u32 %v485, 4294901760
    %487 = vmatpush1.msra.mxu0 %v486
    %488 = vmatprep.subr.mxu0 0.0
    %v489 = vand.u32 %v90, 4294901760
    %v490 = vsub.f32 %v90, %v489
    %v491 = vand.u32 %v490, 4294901760
    %492 = vmatpush1.msra.mxu0 %v491
    %493 = vmatprep.subr.mxu0 0.0
    %v494 = vand.u32 %v91, 4294901760
    %v495 = vsub.f32 %v91, %v494
    %v496 = vand.u32 %v495, 4294901760
    %497 = vmatpush1.msra.mxu0 %v496
    %498 = vmatprep.subr.mxu0 0.0
    %v499 = vand.u32 %v92, 4294901760
    %v500 = vsub.f32 %v92, %v499
    %v501 = vand.u32 %v500, 4294901760
    %502 = vmatpush1.msra.mxu0 %v501
    %503 = vmatprep.subr.mxu0 0.0
    %v504 = vand.u32 %v93, 4294901760
    %v505 = vsub.f32 %v93, %v504
    %v506 = vand.u32 %v505, 4294901760
    %507 = vmatpush1.msra.mxu0 %v506
    %508 = vmatprep.subr.mxu0 0.0
    %509 = vmatpush1.msra.mxu0 0.0
    %510 = vmatprep.subr.mxu0 0.0
    %511 = vmatpush1.msra.mxu0 0.0
    %512 = vmatprep.subr.mxu0 0.0
    %513 = vmatpush1.msra.mxu0 0.0
    %514 = vmatprep.subr.mxu0 0.0
    %515 = vmatpush1.msra.mxu0 0.0
    %516 = vmatprep.subr.mxu0 0.0
    %517 = vmatpush1.msra.mxu0 0.0
    %518 = vmatprep.subr.mxu0 0.0
    %519 = vmatpush1.msra.mxu0 0.0
    %520 = vmatprep.subr.mxu0 0.0
    %521 = vmatpush1.msra.mxu0 0.0
    %522 = vmatprep.subr.mxu0 0.0
    %523 = vmatpush1.msra.mxu0 0.0
    %524 = vmatprep.subr.mxu0 0.0
    %525 = vmatpush1.msra.mxu0 0.0
    %526 = vmatprep.subr.mxu0 0.0
    %527 = vmatpush1.msra.mxu0 0.0
    %528 = vmatprep.subr.mxu0 0.0
    %529 = vmatpush1.msra.mxu0 0.0
    %530 = vmatprep.subr.mxu0 0.0
    %531 = vmatpush1.msra.mxu0 0.0
    %532 = vmatprep.subr.mxu0 0.0
    %533 = vmatpush1.msra.mxu0 0.0
    %534 = vmatprep.subr.mxu0 0.0
    %535 = vmatpush1.msra.mxu0 0.0
    %536 = vmatprep.subr.mxu0 0.0
    %537 = vmatpush1.msra.mxu0 0.0
    %538 = vmatprep.subr.mxu0 0.0
    %539 = vmatpush1.msra.mxu0 0.0
    %540 = vmatprep.subr.mxu0 0.0
    %541 = vmatpush1.msra.mxu0 0.0
    %542 = vmatprep.subr.mxu0 0.0
    %543 = vmatpush1.msra.mxu0 0.0
    %544 = vmatprep.subr.mxu0 0.0
    %545 = vmatpush1.msra.mxu0 0.0
    %546 = vmatprep.subr.mxu0 0.0
    %547 = vmatpush1.msra.mxu0 0.0
    %548 = vmatprep.subr.mxu0 0.0
    %549 = vmatpush1.msra.mxu0 0.0
    %550 = vmatprep.subr.mxu0 0.0
    %551 = vmatpush1.msra.mxu0 0.0
    %552 = vmatprep.subr.mxu0 0.0
    %553 = vmatpush1.msra.mxu0 0.0
    %554 = vmatprep.subr.mxu0 0.0
    %555 = vmatpush1.msra.mxu0 0.0
    %556 = vmatprep.mubr.f32.mxu0 0.0
    %v557 = vand.u32 %v103, 4294901760
    %558 = vmatmul.mubr.f32.gmra.mrb[0].mxu0 %v557
    %v559 = vpop.f32.mrb[0].mxu0
    %v560 = vadd.f32 %v465, %v559
    %v561 = vpop.f32.mrb[0].mxu0
    %562 = vdwg.mxu0
    %563 = vmatprep.subr.mxu0 0.0
    %v564 = vand.u32 %v86, 4294901760
    %565 = vmatpush1.msra.mxu0 %v564
    %566 = vmatprep.subr.mxu0 0.0
    %v567 = vand.u32 %v87, 4294901760
    %568 = vmatpush1.msra.mxu0 %v567
    %569 = vmatprep.subr.mxu0 0.0
    %v570 = vand.u32 %v88, 4294901760
    %571 = vmatpush1.msra.mxu0 %v570
    %572 = vmatprep.subr.mxu0 0.0
    %v573 = vand.u32 %v89, 4294901760
    %574 = vmatpush1.msra.mxu0 %v573
    %575 = vmatprep.subr.mxu0 0.0
    %v576 = vand.u32 %v90, 4294901760
    %577 = vmatpush1.msra.mxu0 %v576
    %578 = vmatprep.subr.mxu0 0.0
    %v579 = vand.u32 %v91, 4294901760
    %580 = vmatpush1.msra.mxu0 %v579
    %581 = vmatprep.subr.mxu0 0.0
    %v582 = vand.u32 %v92, 4294901760
    %583 = vmatpush1.msra.mxu0 %v582
    %584 = vmatprep.subr.mxu0 0.0
    %v585 = vand.u32 %v93, 4294901760
    %586 = vmatpush1.msra.mxu0 %v585
    %587 = vmatprep.subr.mxu0 0.0
    %588 = vmatpush1.msra.mxu0 0.0
    %589 = vmatprep.subr.mxu0 0.0
    %590 = vmatpush1.msra.mxu0 0.0
    %591 = vmatprep.subr.mxu0 0.0
    %592 = vmatpush1.msra.mxu0 0.0
    %593 = vmatprep.subr.mxu0 0.0
    %594 = vmatpush1.msra.mxu0 0.0
    %595 = vmatprep.subr.mxu0 0.0
    %596 = vmatpush1.msra.mxu0 0.0
    %597 = vmatprep.subr.mxu0 0.0
    %598 = vmatpush1.msra.mxu0 0.0
    %599 = vmatprep.subr.mxu0 0.0
    %600 = vmatpush1.msra.mxu0 0.0
    %601 = vmatprep.subr.mxu0 0.0
    %602 = vmatpush1.msra.mxu0 0.0
    %603 = vmatprep.subr.mxu0 0.0
    %604 = vmatpush1.msra.mxu0 0.0
    %605 = vmatprep.subr.mxu0 0.0
    %606 = vmatpush1.msra.mxu0 0.0
    %607 = vmatprep.subr.mxu0 0.0
    %608 = vmatpush1.msra.mxu0 0.0
    %609 = vmatprep.subr.mxu0 0.0
    %610 = vmatpush1.msra.mxu0 0.0
    %611 = vmatprep.subr.mxu0 0.0
    %612 = vmatpush1.msra.mxu0 0.0
    %613 = vmatprep.subr.mxu0 0.0
    %614 = vmatpush1.msra.mxu0 0.0
    %615 = vmatprep.subr.mxu0 0.0
    %616 = vmatpush1.msra.mxu0 0.0
    %617 = vmatprep.subr.mxu0 0.0
    %618 = vmatpush1.msra.mxu0 0.0
    %619 = vmatprep.subr.mxu0 0.0
    %620 = vmatpush1.msra.mxu0 0.0
    %621 = vmatprep.subr.mxu0 0.0
    %622 = vmatpush1.msra.mxu0 0.0
    %623 = vmatprep.subr.mxu0 0.0
    %624 = vmatpush1.msra.mxu0 0.0
    %625 = vmatprep.subr.mxu0 0.0
    %626 = vmatpush1.msra.mxu0 0.0
    %627 = vmatprep.subr.mxu0 0.0
    %628 = vmatpush1.msra.mxu0 0.0
    %629 = vmatprep.subr.mxu0 0.0
    %630 = vmatpush1.msra.mxu0 0.0
    %631 = vmatprep.subr.mxu0 0.0
    %632 = vmatpush1.msra.mxu0 0.0
    %633 = vmatprep.subr.mxu0 0.0
    %634 = vmatpush1.msra.mxu0 0.0
    %635 = vmatprep.mubr.f32.mxu0 0.0
    %v636 = vand.u32 %v103, 4294901760
    %637 = vmatmul.mubr.f32.gmra.mrb[0].mxu0 %v636
    %v638 = vpop.f32.mrb[0].mxu0
    %v639 = vadd.f32 %v560, %v638
    %v640 = vpop.f32.mrb[0].mxu0
    %641 = vdwg.mxu0
    %v642 = vxor.u32 %v639, 2147483648
    %v643 = vmul.f32 %v642, 1.442695
    %v644 = vpow.pop %v643
    %v645 = vadd.f32 %v644, 1.0
    %v646 = vrcp.pop %v645
    %v647 = vmul.f32 1.0, %v646
    %v648 = vtanh.pop %v639
    %v649 = vld [vmem:[%s5] sm:$0xf]
    %651 = vrot.lane.b32.xlu0 %v649, 32
    %v652 = vpop.permute.xlu0 %651
    %v654 = vmul.f32 %v647, %v652
    %656 = vrot.lane.b32.xlu0 %v648, 32
    %v657 = vpop.permute.xlu0 %656
    %v659 = vmul.f32 %v647, %v657
    %661 = vrot.lane.b32.xlu0 %v659, 32
    %v662 = vpop.permute.xlu0 %661
    %v664 = vadd.f32 %v654, %v662
    %v665 = vtanh.pop %v664
    %667 = vrot.lane.b32.xlu0 %v665, 32
    %v668 = vpop.permute.xlu0 %667
    %v670 = vmul.f32 %v647, %v668
    %672 = vrot.lane.b32.xlu0 %v664, 96
    %v673 = vpop.permute.xlu0 %672
    %vm675 = vcmask 257024
    %676 = vst.msk [vmem:[#allocation11] sm:$0xf] %vm675, %v673
    %678 = vrot.lane.b32.xlu0 %v670, 64
    %v679 = vpop.permute.xlu0 %678
    %681 = vst.msk [vmem:[#allocation9] sm:$0xf] %vm675, %v679
    %s682 = scalar_lea.vmem %s4, 4
    %v683 = vld [vmem:[%s682] sm:$0xf]
    %685 = vrot.lane.b32.xlu0 %v683, 32
    %v686 = vpop.permute.xlu0 %685
    %v688 = vsel %vm84, %v679, %v686
    %s689 = scalar_lea.vmem [#allocation7], 64
    %v690 = vld [vmem:[%s689] sm:$0xff]
    %v691 = vld [vmem:[%s689 + $0x8] sm:$0xff]
    %v692 = vld [vmem:[%s689 + $0x10] sm:$0xff]
    %v693 = vld [vmem:[%s689 + $0x18] sm:$0xff]
    %v694 = vld [vmem:[%s689 + $0x20] sm:$0xff]
    %v695 = vld [vmem:[%s689 + $0x28] sm:$0xff]
    %v696 = vld [vmem:[%s689 + $0x30] sm:$0xff]
    %v697 = vld [vmem:[%s689 + $0x38] sm:$0xff]
    %s698 = scalar_lea.vmem %s3, 1
    %v699 = vld [vmem:[%s698] sm:$0x1]
    %v701 = vlaneseq
    %v702 = vshrl.u32 %v701, 7
    %v703 = vsub.s32 0, %v702
    %v704 = vrot.slane %v699, %v703
    %v707 = vsel %vm101, %v688, 0
    %709 = vmatprep.subr.mxu0 0.0
    %v710 = vand.u32 %v690, 4294901760
    %711 = vmatpush1.msra.mxu0 %v710
    %712 = vmatprep.subr.mxu0 0.0
    %v713 = vand.u32 %v691, 4294901760
    %714 = vmatpush1.msra.mxu0 %v713
    %715 = vmatprep.subr.mxu0 0.0
    %v716 = vand.u32 %v692, 4294901760
    %717 = vmatpush1.msra.mxu0 %v716
    %718 = vmatprep.subr.mxu0 0.0
    %v719 = vand.u32 %v693, 4294901760
    %720 = vmatpush1.msra.mxu0 %v719
    %721 = vmatprep.subr.mxu0 0.0
    %v722 = vand.u32 %v694, 4294901760
    %723 = vmatpush1.msra.mxu0 %v722
    %724 = vmatprep.subr.mxu0 0.0
    %v725 = vand.u32 %v695, 4294901760
    %726 = vmatpush1.msra.mxu0 %v725
    %727 = vmatprep.subr.mxu0 0.0
    %v728 = vand.u32 %v696, 4294901760
    %729 = vmatpush1.msra.mxu0 %v728
    %730 = vmatprep.subr.mxu0 0.0
    %v731 = vand.u32 %v697, 4294901760
    %732 = vmatpush1.msra.mxu0 %v731
    %733 = vmatprep.subr.mxu0 0.0
    %734 = vmatpush1.msra.mxu0 0.0
    %735 = vmatprep.subr.mxu0 0.0
    %736 = vmatpush1.msra.mxu0 0.0
    %737 = vmatprep.subr.mxu0 0.0
    %738 = vmatpush1.msra.mxu0 0.0
    %739 = vmatprep.subr.mxu0 0.0
    %740 = vmatpush1.msra.mxu0 0.0
    %741 = vmatprep.subr.mxu0 0.0
    %742 = vmatpush1.msra.mxu0 0.0
    %743 = vmatprep.subr.mxu0 0.0
    %744 = vmatpush1.msra.mxu0 0.0
    %745 = vmatprep.subr.mxu0 0.0
    %746 = vmatpush1.msra.mxu0 0.0
    %747 = vmatprep.subr.mxu0 0.0
    %748 = vmatpush1.msra.mxu0 0.0
    %749 = vmatprep.subr.mxu0 0.0
    %750 = vmatpush1.msra.mxu0 0.0
    %751 = vmatprep.subr.mxu0 0.0
    %752 = vmatpush1.msra.mxu0 0.0
    %753 = vmatprep.subr.mxu0 0.0
    %754 = vmatpush1.msra.mxu0 0.0
    %755 = vmatprep.subr.mxu0 0.0
    %756 = vmatpush1.msra.mxu0 0.0
    %757 = vmatprep.subr.mxu0 0.0
    %758 = vmatpush1.msra.mxu0 0.0
    %759 = vmatprep.subr.mxu0 0.0
    %760 = vmatpush1.msra.mxu0 0.0
    %761 = vmatprep.subr.mxu0 0.0
    %762 = vmatpush1.msra.mxu0 0.0
    %763 = vmatprep.subr.mxu0 0.0
    %764 = vmatpush1.msra.mxu0 0.0
    %765 = vmatprep.subr.mxu0 0.0
    %766 = vmatpush1.msra.mxu0 0.0
    %767 = vmatprep.subr.mxu0 0.0
    %768 = vmatpush1.msra.mxu0 0.0
    %769 = vmatprep.subr.mxu0 0.0
    %770 = vmatpush1.msra.mxu0 0.0
    %771 = vmatprep.subr.mxu0 0.0
    %772 = vmatpush1.msra.mxu0 0.0
    %773 = vmatprep.subr.mxu0 0.0
    %774 = vmatpush1.msra.mxu0 0.0
    %775 = vmatprep.subr.mxu0 0.0
    %776 = vmatpush1.msra.mxu0 0.0
    %777 = vmatprep.subr.mxu0 0.0
    %778 = vmatpush1.msra.mxu0 0.0
    %779 = vmatprep.subr.mxu0 0.0
    %780 = vmatpush1.msra.mxu0 0.0
    %781 = vmatprep.mubr.f32.mxu0 0.0
    %v782 = vand.u32 %v707, 4294901760
    %v783 = vsub.f32 %v707, %v782
    %v784 = vand.u32 %v783, 4294901760
    %v785 = vsub.f32 %v783, %v784
    %v786 = vand.u32 %v785, 4294901760
    %787 = vmatmul.mubr.f32.gmra.mrb[0].mxu0 %v786
    %v788 = vpop.f32.mrb[0].mxu0
    %v789 = vadd.f32 %v704, %v788
    %v790 = vpop.f32.mrb[0].mxu0
    %791 = vdwg.mxu0
    %792 = vmatprep.subr.mxu0 0.0
    %v793 = vand.u32 %v690, 4294901760
    %v794 = vsub.f32 %v690, %v793
    %v795 = vand.u32 %v794, 4294901760
    %v796 = vsub.f32 %v794, %v795
    %v797 = vand.u32 %v796, 4294901760
    %798 = vmatpush1.msra.mxu0 %v797
    %799 = vmatprep.subr.mxu0 0.0
    %v800 = vand.u32 %v691, 4294901760
    %v801 = vsub.f32 %v691, %v800
    %v802 = vand.u32 %v801, 4294901760
    %v803 = vsub.f32 %v801, %v802
    %v804 = vand.u32 %v803, 4294901760
    %805 = vmatpush1.msra.mxu0 %v804
    %806 = vmatprep.subr.mxu0 0.0
    %v807 = vand.u32 %v692, 4294901760
    %v808 = vsub.f32 %v692, %v807
    %v809 = vand.u32 %v808, 4294901760
    %v810 = vsub.f32 %v808, %v809
    %v811 = vand.u32 %v810, 4294901760
    %812 = vmatpush1.msra.mxu0 %v811
    %813 = vmatprep.subr.mxu0 0.0
    %v814 = vand.u32 %v693, 4294901760
    %v815 = vsub.f32 %v693, %v814
    %v816 = vand.u32 %v815, 4294901760
    %v817 = vsub.f32 %v815, %v816
    %v818 = vand.u32 %v817, 4294901760
    %819 = vmatpush1.msra.mxu0 %v818
    %820 = vmatprep.subr.mxu0 0.0
    %v821 = vand.u32 %v694, 4294901760
    %v822 = vsub.f32 %v694, %v821
    %v823 = vand.u32 %v822, 4294901760
    %v824 = vsub.f32 %v822, %v823
    %v825 = vand.u32 %v824, 4294901760
    %826 = vmatpush1.msra.mxu0 %v825
    %827 = vmatprep.subr.mxu0 0.0
    %v828 = vand.u32 %v695, 4294901760
    %v829 = vsub.f32 %v695, %v828
    %v830 = vand.u32 %v829, 4294901760
    %v831 = vsub.f32 %v829, %v830
    %v832 = vand.u32 %v831, 4294901760
    %833 = vmatpush1.msra.mxu0 %v832
    %834 = vmatprep.subr.mxu0 0.0
    %v835 = vand.u32 %v696, 4294901760
    %v836 = vsub.f32 %v696, %v835
    %v837 = vand.u32 %v836, 4294901760
    %v838 = vsub.f32 %v836, %v837
    %v839 = vand.u32 %v838, 4294901760
    %840 = vmatpush1.msra.mxu0 %v839
    %841 = vmatprep.subr.mxu0 0.0
    %v842 = vand.u32 %v697, 4294901760
    %v843 = vsub.f32 %v697, %v842
    %v844 = vand.u32 %v843, 4294901760
    %v845 = vsub.f32 %v843, %v844
    %v846 = vand.u32 %v845, 4294901760
    %847 = vmatpush1.msra.mxu0 %v846
    %848 = vmatprep.subr.mxu0 0.0
    %849 = vmatpush1.msra.mxu0 0.0
    %850 = vmatprep.subr.mxu0 0.0
    %851 = vmatpush1.msra.mxu0 0.0
    %852 = vmatprep.subr.mxu0 0.0
    %853 = vmatpush1.msra.mxu0 0.0
    %854 = vmatprep.subr.mxu0 0.0
    %855 = vmatpush1.msra.mxu0 0.0
    %856 = vmatprep.subr.mxu0 0.0
    %857 = vmatpush1.msra.mxu0 0.0
    %858 = vmatprep.subr.mxu0 0.0
    %859 = vmatpush1.msra.mxu0 0.0
    %860 = vmatprep.subr.mxu0 0.0
    %861 = vmatpush1.msra.mxu0 0.0
    %862 = vmatprep.subr.mxu0 0.0
    %863 = vmatpush1.msra.mxu0 0.0
    %864 = vmatprep.subr.mxu0 0.0
    %865 = vmatpush1.msra.mxu0 0.0
    %866 = vmatprep.subr.mxu0 0.0
    %867 = vmatpush1.msra.mxu0 0.0
    %868 = vmatprep.subr.mxu0 0.0
    %869 = vmatpush1.msra.mxu0 0.0
    %870 = vmatprep.subr.mxu0 0.0
    %871 = vmatpush1.msra.mxu0 0.0
    %872 = vmatprep.subr.mxu0 0.0
    %873 = vmatpush1.msra.mxu0 0.0
    %874 = vmatprep.subr.mxu0 0.0
    %875 = vmatpush1.msra.mxu0 0.0
    %876 = vmatprep.subr.mxu0 0.0
    %877 = vmatpush1.msra.mxu0 0.0
    %878 = vmatprep.subr.mxu0 0.0
    %879 = vmatpush1.msra.mxu0 0.0
    %880 = vmatprep.subr.mxu0 0.0
    %881 = vmatpush1.msra.mxu0 0.0
    %882 = vmatprep.subr.mxu0 0.0
    %883 = vmatpush1.msra.mxu0 0.0
    %884 = vmatprep.subr.mxu0 0.0
    %885 = vmatpush1.msra.mxu0 0.0
    %886 = vmatprep.subr.mxu0 0.0
    %887 = vmatpush1.msra.mxu0 0.0
    %888 = vmatprep.subr.mxu0 0.0
    %889 = vmatpush1.msra.mxu0 0.0
    %890 = vmatprep.subr.mxu0 0.0
    %891 = vmatpush1.msra.mxu0 0.0
    %892 = vmatprep.subr.mxu0 0.0
    %893 = vmatpush1.msra.mxu0 0.0
    %894 = vmatprep.subr.mxu0 0.0
    %895 = vmatpush1.msra.mxu0 0.0
    %896 = vmatprep.mubr.f32.mxu0 0.0
    %v897 = vand.u32 %v707, 4294901760
    %898 = vmatmul.mubr.f32.gmra.mrb[0].mxu0 %v897
    %v899 = vpop.f32.mrb[0].mxu0
    %v900 = vadd.f32 %v789, %v899
    %v901 = vpop.f32.mrb[0].mxu0
    %902 = vdwg.mxu0
    %903 = vmatprep.subr.mxu0 0.0
    %v904 = vand.u32 %v690, 4294901760
    %v905 = vsub.f32 %v690, %v904
    %906 = vmatpush1.msra.mxu0 %v905
    %907 = vmatprep.subr.mxu0 0.0
    %v908 = vand.u32 %v691, 4294901760
    %v909 = vsub.f32 %v691, %v908
    %910 = vmatpush1.msra.mxu0 %v909
    %911 = vmatprep.subr.mxu0 0.0
    %v912 = vand.u32 %v692, 4294901760
    %v913 = vsub.f32 %v692, %v912
    %914 = vmatpush1.msra.mxu0 %v913
    %915 = vmatprep.subr.mxu0 0.0
    %v916 = vand.u32 %v693, 4294901760
    %v917 = vsub.f32 %v693, %v916
    %918 = vmatpush1.msra.mxu0 %v917
    %919 = vmatprep.subr.mxu0 0.0
    %v920 = vand.u32 %v694, 4294901760
    %v921 = vsub.f32 %v694, %v920
    %922 = vmatpush1.msra.mxu0 %v921
    %923 = vmatprep.subr.mxu0 0.0
    %v924 = vand.u32 %v695, 4294901760
    %v925 = vsub.f32 %v695, %v924
    %926 = vmatpush1.msra.mxu0 %v925
    %927 = vmatprep.subr.mxu0 0.0
    %v928 = vand.u32 %v696, 4294901760
    %v929 = vsub.f32 %v696, %v928
    %930 = vmatpush1.msra.mxu0 %v929
    %931 = vmatprep.subr.mxu0 0.0
    %v932 = vand.u32 %v697, 4294901760
    %v933 = vsub.f32 %v697, %v932
    %934 = vmatpush1.msra.mxu0 %v933
    %935 = vmatprep.subr.mxu0 0.0
    %936 = vmatpush1.msra.mxu0 0.0
    %937 = vmatprep.subr.mxu0 0.0
    %938 = vmatpush1.msra.mxu0 0.0
    %939 = vmatprep.subr.mxu0 0.0
    %940 = vmatpush1.msra.mxu0 0.0
    %941 = vmatprep.subr.mxu0 0.0
    %942 = vmatpush1.msra.mxu0 0.0
    %943 = vmatprep.subr.mxu0 0.0
    %944 = vmatpush1.msra.mxu0 0.0
    %945 = vmatprep.subr.mxu0 0.0
    %946 = vmatpush1.msra.mxu0 0.0
    %947 = vmatprep.subr.mxu0 0.0
    %948 = vmatpush1.msra.mxu0 0.0
    %949 = vmatprep.subr.mxu0 0.0
    %950 = vmatpush1.msra.mxu0 0.0
    %951 = vmatprep.subr.mxu0 0.0
    %952 = vmatpush1.msra.mxu0 0.0
    %953 = vmatprep.subr.mxu0 0.0
    %954 = vmatpush1.msra.mxu0 0.0
    %955 = vmatprep.subr.mxu0 0.0
    %956 = vmatpush1.msra.mxu0 0.0
    %957 = vmatprep.subr.mxu0 0.0
    %958 = vmatpush1.msra.mxu0 0.0
    %959 = vmatprep.subr.mxu0 0.0
    %960 = vmatpush1.msra.mxu0 0.0
    %961 = vmatprep.subr.mxu0 0.0
    %962 = vmatpush1.msra.mxu0 0.0
    %963 = vmatprep.subr.mxu0 0.0
    %964 = vmatpush1.msra.mxu0 0.0
    %965 = vmatprep.subr.mxu0 0.0
    %966 = vmatpush1.msra.mxu0 0.0
    %967 = vmatprep.subr.mxu0 0.0
    %968 = vmatpush1.msra.mxu0 0.0
    %969 = vmatprep.subr.mxu0 0.0
    %970 = vmatpush1.msra.mxu0 0.0
    %971 = vmatprep.subr.mxu0 0.0
    %972 = vmatpush1.msra.mxu0 0.0
    %973 = vmatprep.subr.mxu0 0.0
    %974 = vmatpush1.msra.mxu0 0.0
    %975 = vmatprep.subr.mxu0 0.0
    %976 = vmatpush1.msra.mxu0 0.0
    %977 = vmatprep.subr.mxu0 0.0
    %978 = vmatpush1.msra.mxu0 0.0
    %979 = vmatprep.subr.mxu0 0.0
    %980 = vmatpush1.msra.mxu0 0.0
    %981 = vmatprep.subr.mxu0 0.0
    %982 = vmatpush1.msra.mxu0 0.0
    %983 = vmatprep.mubr.f32.mxu0 0.0
    %v984 = vand.u32 %v707, 4294901760
    %v985 = vsub.f32 %v707, %v984
    %986 = vmatmul.mubr.f32.gmra.mrb[0].mxu0 %v985
    %v987 = vpop.f32.mrb[0].mxu0
    %v988 = vadd.f32 %v900, %v987
    %v989 = vpop.f32.mrb[0].mxu0
    %990 = vdwg.mxu0
    %991 = vmatprep.subr.mxu0 0.0
    %v992 = vand.u32 %v690, 4294901760
    %993 = vmatpush1.msra.mxu0 %v992
    %994 = vmatprep.subr.mxu0 0.0
    %v995 = vand.u32 %v691, 4294901760
    %996 = vmatpush1.msra.mxu0 %v995
    %997 = vmatprep.subr.mxu0 0.0
    %v998 = vand.u32 %v692, 4294901760
    %999 = vmatpush1.msra.mxu0 %v998
    %1000 = vmatprep.subr.mxu0 0.0
    %v1001 = vand.u32 %v693, 4294901760
    %1002 = vmatpush1.msra.mxu0 %v1001
    %1003 = vmatprep.subr.mxu0 0.0
    %v1004 = vand.u32 %v694, 4294901760
    %1005 = vmatpush1.msra.mxu0 %v1004
    %1006 = vmatprep.subr.mxu0 0.0
    %v1007 = vand.u32 %v695, 4294901760
    %1008 = vmatpush1.msra.mxu0 %v1007
    %1009 = vmatprep.subr.mxu0 0.0
    %v1010 = vand.u32 %v696, 4294901760
    %1011 = vmatpush1.msra.mxu0 %v1010
    %1012 = vmatprep.subr.mxu0 0.0
    %v1013 = vand.u32 %v697, 4294901760
    %1014 = vmatpush1.msra.mxu0 %v1013
    %1015 = vmatprep.subr.mxu0 0.0
    %1016 = vmatpush1.msra.mxu0 0.0
    %1017 = vmatprep.subr.mxu0 0.0
    %1018 = vmatpush1.msra.mxu0 0.0
    %1019 = vmatprep.subr.mxu0 0.0
    %1020 = vmatpush1.msra.mxu0 0.0
    %1021 = vmatprep.subr.mxu0 0.0
    %1022 = vmatpush1.msra.mxu0 0.0
    %1023 = vmatprep.subr.mxu0 0.0
    %1024 = vmatpush1.msra.mxu0 0.0
    %1025 = vmatprep.subr.mxu0 0.0
    %1026 = vmatpush1.msra.mxu0 0.0
    %1027 = vmatprep.subr.mxu0 0.0
    %1028 = vmatpush1.msra.mxu0 0.0
    %1029 = vmatprep.subr.mxu0 0.0
    %1030 = vmatpush1.msra.mxu0 0.0
    %1031 = vmatprep.subr.mxu0 0.0
    %1032 = vmatpush1.msra.mxu0 0.0
    %1033 = vmatprep.subr.mxu0 0.0
    %1034 = vmatpush1.msra.mxu0 0.0
    %1035 = vmatprep.subr.mxu0 0.0
    %1036 = vmatpush1.msra.mxu0 0.0
    %1037 = vmatprep.subr.mxu0 0.0
    %1038 = vmatpush1.msra.mxu0 0.0
    %1039 = vmatprep.subr.mxu0 0.0
    %1040 = vmatpush1.msra.mxu0 0.0
    %1041 = vmatprep.subr.mxu0 0.0
    %1042 = vmatpush1.msra.mxu0 0.0
    %1043 = vmatprep.subr.mxu0 0.0
    %1044 = vmatpush1.msra.mxu0 0.0
    %1045 = vmatprep.subr.mxu0 0.0
    %1046 = vmatpush1.msra.mxu0 0.0
    %1047 = vmatprep.subr.mxu0 0.0
    %1048 = vmatpush1.msra.mxu0 0.0
    %1049 = vmatprep.subr.mxu0 0.0
    %1050 = vmatpush1.msra.mxu0 0.0
    %1051 = vmatprep.subr.mxu0 0.0
    %1052 = vmatpush1.msra.mxu0 0.0
    %1053 = vmatprep.subr.mxu0 0.0
    %1054 = vmatpush1.msra.mxu0 0.0
    %1055 = vmatprep.subr.mxu0 0.0
    %1056 = vmatpush1.msra.mxu0 0.0
    %1057 = vmatprep.subr.mxu0 0.0
    %1058 = vmatpush1.msra.mxu0 0.0
    %1059 = vmatprep.subr.mxu0 0.0
    %1060 = vmatpush1.msra.mxu0 0.0
    %1061 = vmatprep.subr.mxu0 0.0
    %1062 = vmatpush1.msra.mxu0 0.0
    %1063 = vmatprep.mubr.f32.mxu0 0.0
    %v1064 = vand.u32 %v707, 4294901760
    %v1065 = vsub.f32 %v707, %v1064
    %v1066 = vand.u32 %v1065, 4294901760
    %1067 = vmatmul.mubr.f32.gmra.mrb[0].mxu0 %v1066
    %v1068 = vpop.f32.mrb[0].mxu0
    %v1069 = vadd.f32 %v988, %v1068
    %v1070 = vpop.f32.mrb[0].mxu0
    %1071 = vdwg.mxu0
    %1072 = vmatprep.subr.mxu0 0.0
    %v1073 = vand.u32 %v690, 4294901760
    %v1074 = vsub.f32 %v690, %v1073
    %v1075 = vand.u32 %v1074, 4294901760
    %1076 = vmatpush1.msra.mxu0 %v1075
    %1077 = vmatprep.subr.mxu0 0.0
    %v1078 = vand.u32 %v691, 4294901760
    %v1079 = vsub.f32 %v691, %v1078
    %v1080 = vand.u32 %v1079, 4294901760
    %1081 = vmatpush1.msra.mxu0 %v1080
    %1082 = vmatprep.subr.mxu0 0.0
    %v1083 = vand.u32 %v692, 4294901760
    %v1084 = vsub.f32 %v692, %v1083
    %v1085 = vand.u32 %v1084, 4294901760
    %1086 = vmatpush1.msra.mxu0 %v1085
    %1087 = vmatprep.subr.mxu0 0.0
    %v1088 = vand.u32 %v693, 4294901760
    %v1089 = vsub.f32 %v693, %v1088
    %v1090 = vand.u32 %v1089, 4294901760
    %1091 = vmatpush1.msra.mxu0 %v1090
    %1092 = vmatprep.subr.mxu0 0.0
    %v1093 = vand.u32 %v694, 4294901760
    %v1094 = vsub.f32 %v694, %v1093
    %v1095 = vand.u32 %v1094, 4294901760
    %1096 = vmatpush1.msra.mxu0 %v1095
    %1097 = vmatprep.subr.mxu0 0.0
    %v1098 = vand.u32 %v695, 4294901760
    %v1099 = vsub.f32 %v695, %v1098
    %v1100 = vand.u32 %v1099, 4294901760
    %1101 = vmatpush1.msra.mxu0 %v1100
    %1102 = vmatprep.subr.mxu0 0.0
    %v1103 = vand.u32 %v696, 4294901760
    %v1104 = vsub.f32 %v696, %v1103
    %v1105 = vand.u32 %v1104, 4294901760
    %1106 = vmatpush1.msra.mxu0 %v1105
    %1107 = vmatprep.subr.mxu0 0.0
    %v1108 = vand.u32 %v697, 4294901760
    %v1109 = vsub.f32 %v697, %v1108
    %v1110 = vand.u32 %v1109, 4294901760
    %1111 = vmatpush1.msra.mxu0 %v1110
    %1112 = vmatprep.subr.mxu0 0.0
    %1113 = vmatpush1.msra.mxu0 0.0
    %1114 = vmatprep.subr.mxu0 0.0
    %1115 = vmatpush1.msra.mxu0 0.0
    %1116 = vmatprep.subr.mxu0 0.0
    %1117 = vmatpush1.msra.mxu0 0.0
    %1118 = vmatprep.subr.mxu0 0.0
    %1119 = vmatpush1.msra.mxu0 0.0
    %1120 = vmatprep.subr.mxu0 0.0
    %1121 = vmatpush1.msra.mxu0 0.0
    %1122 = vmatprep.subr.mxu0 0.0
    %1123 = vmatpush1.msra.mxu0 0.0
    %1124 = vmatprep.subr.mxu0 0.0
    %1125 = vmatpush1.msra.mxu0 0.0
    %1126 = vmatprep.subr.mxu0 0.0
    %1127 = vmatpush1.msra.mxu0 0.0
    %1128 = vmatprep.subr.mxu0 0.0
    %1129 = vmatpush1.msra.mxu0 0.0
    %1130 = vmatprep.subr.mxu0 0.0
    %1131 = vmatpush1.msra.mxu0 0.0
    %1132 = vmatprep.subr.mxu0 0.0
    %1133 = vmatpush1.msra.mxu0 0.0
    %1134 = vmatprep.subr.mxu0 0.0
    %1135 = vmatpush1.msra.mxu0 0.0
    %1136 = vmatprep.subr.mxu0 0.0
    %1137 = vmatpush1.msra.mxu0 0.0
    %1138 = vmatprep.subr.mxu0 0.0
    %1139 = vmatpush1.msra.mxu0 0.0
    %1140 = vmatprep.subr.mxu0 0.0
    %1141 = vmatpush1.msra.mxu0 0.0
    %1142 = vmatprep.subr.mxu0 0.0
    %1143 = vmatpush1.msra.mxu0 0.0
    %1144 = vmatprep.subr.mxu0 0.0
    %1145 = vmatpush1.msra.mxu0 0.0
    %1146 = vmatprep.subr.mxu0 0.0
    %1147 = vmatpush1.msra.mxu0 0.0
    %1148 = vmatprep.subr.mxu0 0.0
    %1149 = vmatpush1.msra.mxu0 0.0
    %1150 = vmatprep.subr.mxu0 0.0
    %1151 = vmatpush1.msra.mxu0 0.0
    %1152 = vmatprep.subr.mxu0 0.0
    %1153 = vmatpush1.msra.mxu0 0.0
    %1154 = vmatprep.subr.mxu0 0.0
    %1155 = vmatpush1.msra.mxu0 0.0
    %1156 = vmatprep.subr.mxu0 0.0
    %1157 = vmatpush1.msra.mxu0 0.0
    %1158 = vmatprep.subr.mxu0 0.0
    %1159 = vmatpush1.msra.mxu0 0.0
    %1160 = vmatprep.mubr.f32.mxu0 0.0
    %v1161 = vand.u32 %v707, 4294901760
    %1162 = vmatmul.mubr.f32.gmra.mrb[0].mxu0 %v1161
    %v1163 = vpop.f32.mrb[0].mxu0
    %v1164 = vadd.f32 %v1069, %v1163
    %v1165 = vpop.f32.mrb[0].mxu0
    %1166 = vdwg.mxu0
    %1167 = vmatprep.subr.mxu0 0.0
    %v1168 = vand.u32 %v690, 4294901760
    %1169 = vmatpush1.msra.mxu0 %v1168
    %1170 = vmatprep.subr.mxu0 0.0
    %v1171 = vand.u32 %v691, 4294901760
    %1172 = vmatpush1.msra.mxu0 %v1171
    %1173 = vmatprep.subr.mxu0 0.0
    %v1174 = vand.u32 %v692, 4294901760
    %1175 = vmatpush1.msra.mxu0 %v1174
    %1176 = vmatprep.subr.mxu0 0.0
    %v1177 = vand.u32 %v693, 4294901760
    %1178 = vmatpush1.msra.mxu0 %v1177
    %1179 = vmatprep.subr.mxu0 0.0
    %v1180 = vand.u32 %v694, 4294901760
    %1181 = vmatpush1.msra.mxu0 %v1180
    %1182 = vmatprep.subr.mxu0 0.0
    %v1183 = vand.u32 %v695, 4294901760
    %1184 = vmatpush1.msra.mxu0 %v1183
    %1185 = vmatprep.subr.mxu0 0.0
    %v1186 = vand.u32 %v696, 4294901760
    %1187 = vmatpush1.msra.mxu0 %v1186
    %1188 = vmatprep.subr.mxu0 0.0
    %v1189 = vand.u32 %v697, 4294901760
    %1190 = vmatpush1.msra.mxu0 %v1189
    %1191 = vmatprep.subr.mxu0 0.0
    %1192 = vmatpush1.msra.mxu0 0.0
    %1193 = vmatprep.subr.mxu0 0.0
    %1194 = vmatpush1.msra.mxu0 0.0
    %1195 = vmatprep.subr.mxu0 0.0
    %1196 = vmatpush1.msra.mxu0 0.0
    %1197 = vmatprep.subr.mxu0 0.0
    %1198 = vmatpush1.msra.mxu0 0.0
    %1199 = vmatprep.subr.mxu0 0.0
    %1200 = vmatpush1.msra.mxu0 0.0
    %1201 = vmatprep.subr.mxu0 0.0
    %1202 = vmatpush1.msra.mxu0 0.0
    %1203 = vmatprep.subr.mxu0 0.0
    %1204 = vmatpush1.msra.mxu0 0.0
    %1205 = vmatprep.subr.mxu0 0.0
    %1206 = vmatpush1.msra.mxu0 0.0
    %1207 = vmatprep.subr.mxu0 0.0
    %1208 = vmatpush1.msra.mxu0 0.0
    %1209 = vmatprep.subr.mxu0 0.0
    %1210 = vmatpush1.msra.mxu0 0.0
    %1211 = vmatprep.subr.mxu0 0.0
    %1212 = vmatpush1.msra.mxu0 0.0
    %1213 = vmatprep.subr.mxu0 0.0
    %1214 = vmatpush1.msra.mxu0 0.0
    %1215 = vmatprep.subr.mxu0 0.0
    %1216 = vmatpush1.msra.mxu0 0.0
    %1217 = vmatprep.subr.mxu0 0.0
    %1218 = vmatpush1.msra.mxu0 0.0
    %1219 = vmatprep.subr.mxu0 0.0
    %1220 = vmatpush1.msra.mxu0 0.0
    %1221 = vmatprep.subr.mxu0 0.0
    %1222 = vmatpush1.msra.mxu0 0.0
    %1223 = vmatprep.subr.mxu0 0.0
    %1224 = vmatpush1.msra.mxu0 0.0
    %1225 = vmatprep.subr.mxu0 0.0
    %1226 = vmatpush1.msra.mxu0 0.0
    %1227 = vmatprep.subr.mxu0 0.0
    %1228 = vmatpush1.msra.mxu0 0.0
    %1229 = vmatprep.subr.mxu0 0.0
    %1230 = vmatpush1.msra.mxu0 0.0
    %1231 = vmatprep.subr.mxu0 0.0
    %1232 = vmatpush1.msra.mxu0 0.0
    %1233 = vmatprep.subr.mxu0 0.0
    %1234 = vmatpush1.msra.mxu0 0.0
    %1235 = vmatprep.subr.mxu0 0.0
    %1236 = vmatpush1.msra.mxu0 0.0
    %1237 = vmatprep.subr.mxu0 0.0
    %1238 = vmatpush1.msra.mxu0 0.0
    %1239 = vmatprep.mubr.f32.mxu0 0.0
    %v1240 = vand.u32 %v707, 4294901760
    %1241 = vmatmul.mubr.f32.gmra.mrb[0].mxu0 %v1240
    %v1242 = vpop.f32.mrb[0].mxu0
    %v1243 = vadd.f32 %v1164, %v1242
    %v1244 = vpop.f32.mrb[0].mxu0
    %1245 = vdwg.mxu0
    %v1246 = vxor.u32 %v1243, 2147483648
    %v1247 = vmul.f32 %v1246, 1.442695
    %v1248 = vpow.pop %v1247
    %v1249 = vadd.f32 %v1248, 1.0
    %v1250 = vrcp.pop %v1249
    %v1251 = vmul.f32 1.0, %v1250
    %v1252 = vtanh.pop %v1243
    %s1253 = scalar_lea.vmem %s5, 4
    %v1254 = vld [vmem:[%s1253] sm:$0xf]
    %1256 = vrot.lane.b32.xlu0 %v1254, 32
    %v1257 = vpop.permute.xlu0 %1256
    %v1259 = vmul.f32 %v1251, %v1257
    %1261 = vrot.lane.b32.xlu0 %v1252, 32
    %v1262 = vpop.permute.xlu0 %1261
    %v1264 = vmul.f32 %v1251, %v1262
    %1266 = vrot.lane.b32.xlu0 %v1264, 32
    %v1267 = vpop.permute.xlu0 %1266
    %v1269 = vadd.f32 %v1259, %v1267
    %v1270 = vtanh.pop %v1269
    %1272 = vrot.lane.b32.xlu0 %v1270, 32
    %v1273 = vpop.permute.xlu0 %1272
    %v1275 = vmul.f32 %v1251, %v1273
    %1277 = vrot.lane.b32.xlu0 %v1269, 96
    %v1278 = vpop.permute.xlu0 %1277
    %s1280 = scalar_lea.vmem [#allocation11], 4
    %1281 = vst.msk [vmem:[%s1280] sm:$0xf] %vm675, %v1278
    %1283 = vrot.lane.b32.xlu0 %v1275, 64
    %v1284 = vpop.permute.xlu0 %1283
    %s1286 = scalar_lea.vmem [#allocation9], 4
    %1287 = vst.msk [vmem:[%s1286] sm:$0xf] %vm675, %v1284
    %v1288 = vld [vmem:[%s6] sm:$0xff]
    %v1289 = vld [vmem:[%s6 + $0x8] sm:$0xff]
    %v1290 = vld [vmem:[%s6 + $0x10] sm:$0xff]
    %v1291 = vld [vmem:[%s6 + $0x18] sm:$0xff]
    %v1292 = vld [vmem:[%s7] sm:$0x1]
    %v1294 = vlaneseq
    %v1295 = vshrl.u32 %v1294, 7
    %v1296 = vsub.s32 0, %v1295
    %v1297 = vrot.slane %v1292, %v1296
    %v1299 = vsel %vm84, %v1284, 0
    %1301 = vmatprep.subr.mxu0 0.0
    %v1302 = vand.u32 %v1288, 4294901760
    %1303 = vmatpush1.msra.mxu0 %v1302
    %1304 = vmatprep.subr.mxu0 0.0
    %v1305 = vand.u32 %v1289, 4294901760
    %1306 = vmatpush1.msra.mxu0 %v1305
    %1307 = vmatprep.subr.mxu0 0.0
    %v1308 = vand.u32 %v1290, 4294901760
    %1309 = vmatpush1.msra.mxu0 %v1308
    %1310 = vmatprep.subr.mxu0 0.0
    %v1311 = vand.u32 %v1291, 4294901760
    %1312 = vmatpush1.msra.mxu0 %v1311
    %1313 = vmatprep.subr.mxu0 0.0
    %1314 = vmatpush1.msra.mxu0 0.0
    %1315 = vmatprep.subr.mxu0 0.0
    %1316 = vmatpush1.msra.mxu0 0.0
    %1317 = vmatprep.subr.mxu0 0.0
    %1318 = vmatpush1.msra.mxu0 0.0
    %1319 = vmatprep.subr.mxu0 0.0
    %1320 = vmatpush1.msra.mxu0 0.0
    %1321 = vmatprep.subr.mxu0 0.0
    %1322 = vmatpush1.msra.mxu0 0.0
    %1323 = vmatprep.subr.mxu0 0.0
    %1324 = vmatpush1.msra.mxu0 0.0
    %1325 = vmatprep.subr.mxu0 0.0
    %1326 = vmatpush1.msra.mxu0 0.0
    %1327 = vmatprep.subr.mxu0 0.0
    %1328 = vmatpush1.msra.mxu0 0.0
    %1329 = vmatprep.subr.mxu0 0.0
    %1330 = vmatpush1.msra.mxu0 0.0
    %1331 = vmatprep.subr.mxu0 0.0
    %1332 = vmatpush1.msra.mxu0 0.0
    %1333 = vmatprep.subr.mxu0 0.0
    %1334 = vmatpush1.msra.mxu0 0.0
    %1335 = vmatprep.subr.mxu0 0.0
    %1336 = vmatpush1.msra.mxu0 0.0
    %1337 = vmatprep.subr.mxu0 0.0
    %1338 = vmatpush1.msra.mxu0 0.0
    %1339 = vmatprep.subr.mxu0 0.0
    %1340 = vmatpush1.msra.mxu0 0.0
    %1341 = vmatprep.subr.mxu0 0.0
    %1342 = vmatpush1.msra.mxu0 0.0
    %1343 = vmatprep.subr.mxu0 0.0
    %1344 = vmatpush1.msra.mxu0 0.0
    %1345 = vmatprep.subr.mxu0 0.0
    %1346 = vmatpush1.msra.mxu0 0.0
    %1347 = vmatprep.subr.mxu0 0.0
    %1348 = vmatpush1.msra.mxu0 0.0
    %1349 = vmatprep.subr.mxu0 0.0
    %1350 = vmatpush1.msra.mxu0 0.0
    %1351 = vmatprep.subr.mxu0 0.0
    %1352 = vmatpush1.msra.mxu0 0.0
    %1353 = vmatprep.subr.mxu0 0.0
    %1354 = vmatpush1.msra.mxu0 0.0
    %1355 = vmatprep.subr.mxu0 0.0
    %1356 = vmatpush1.msra.mxu0 0.0
    %1357 = vmatprep.subr.mxu0 0.0
    %1358 = vmatpush1.msra.mxu0 0.0
    %1359 = vmatprep.subr.mxu0 0.0
    %1360 = vmatpush1.msra.mxu0 0.0
    %1361 = vmatprep.subr.mxu0 0.0
    %1362 = vmatpush1.msra.mxu0 0.0
    %1363 = vmatprep.subr.mxu0 0.0
    %1364 = vmatpush1.msra.mxu0 0.0
    %1365 = vmatprep.subr.mxu0 0.0
    %1366 = vmatpush1.msra.mxu0 0.0
    %1367 = vmatprep.subr.mxu0 0.0
    %1368 = vmatpush1.msra.mxu0 0.0
    %1369 = vmatprep.mubr.f32.mxu0 0.0
    %v1370 = vand.u32 %v1299, 4294901760
    %v1371 = vsub.f32 %v1299, %v1370
    %v1372 = vand.u32 %v1371, 4294901760
    %v1373 = vsub.f32 %v1371, %v1372
    %v1374 = vand.u32 %v1373, 4294901760
    %1375 = vmatmul.mubr.f32.gmra.mrb[0].mxu0 %v1374
    %v1376 = vpop.f32.mrb[0].mxu0
    %v1377 = vadd.f32 %v1297, %v1376
    %v1378 = vpop.f32.mrb[0].mxu0
    %1379 = vdwg.mxu0
    %1380 = vmatprep.subr.mxu0 0.0
    %v1381 = vand.u32 %v1288, 4294901760
    %v1382 = vsub.f32 %v1288, %v1381
    %v1383 = vand.u32 %v1382, 4294901760
    %v1384 = vsub.f32 %v1382, %v1383
    %v1385 = vand.u32 %v1384, 4294901760
    %1386 = vmatpush1.msra.mxu0 %v1385
    %1387 = vmatprep.subr.mxu0 0.0
    %v1388 = vand.u32 %v1289, 4294901760
    %v1389 = vsub.f32 %v1289, %v1388
    %v1390 = vand.u32 %v1389, 4294901760
    %v1391 = vsub.f32 %v1389, %v1390
    %v1392 = vand.u32 %v1391, 4294901760
    %1393 = vmatpush1.msra.mxu0 %v1392
    %1394 = vmatprep.subr.mxu0 0.0
    %v1395 = vand.u32 %v1290, 4294901760
    %v1396 = vsub.f32 %v1290, %v1395
    %v1397 = vand.u32 %v1396, 4294901760
    %v1398 = vsub.f32 %v1396, %v1397
    %v1399 = vand.u32 %v1398, 4294901760
    %1400 = vmatpush1.msra.mxu0 %v1399
    %1401 = vmatprep.subr.mxu0 0.0
    %v1402 = vand.u32 %v1291, 4294901760
    %v1403 = vsub.f32 %v1291, %v1402
    %v1404 = vand.u32 %v1403, 4294901760
    %v1405 = vsub.f32 %v1403, %v1404
    %v1406 = vand.u32 %v1405, 4294901760
    %1407 = vmatpush1.msra.mxu0 %v1406
    %1408 = vmatprep.subr.mxu0 0.0
    %1409 = vmatpush1.msra.mxu0 0.0
    %1410 = vmatprep.subr.mxu0 0.0
    %1411 = vmatpush1.msra.mxu0 0.0
    %1412 = vmatprep.subr.mxu0 0.0
    %1413 = vmatpush1.msra.mxu0 0.0
    %1414 = vmatprep.subr.mxu0 0.0
    %1415 = vmatpush1.msra.mxu0 0.0
    %1416 = vmatprep.subr.mxu0 0.0
    %1417 = vmatpush1.msra.mxu0 0.0
    %1418 = vmatprep.subr.mxu0 0.0
    %1419 = vmatpush1.msra.mxu0 0.0
    %1420 = vmatprep.subr.mxu0 0.0
    %1421 = vmatpush1.msra.mxu0 0.0
    %1422 = vmatprep.subr.mxu0 0.0
    %1423 = vmatpush1.msra.mxu0 0.0
    %1424 = vmatprep.subr.mxu0 0.0
    %1425 = vmatpush1.msra.mxu0 0.0
    %1426 = vmatprep.subr.mxu0 0.0
    %1427 = vmatpush1.msra.mxu0 0.0
    %1428 = vmatprep.subr.mxu0 0.0
    %1429 = vmatpush1.msra.mxu0 0.0
    %1430 = vmatprep.subr.mxu0 0.0
    %1431 = vmatpush1.msra.mxu0 0.0
    %1432 = vmatprep.subr.mxu0 0.0
    %1433 = vmatpush1.msra.mxu0 0.0
    %1434 = vmatprep.subr.mxu0 0.0
    %1435 = vmatpush1.msra.mxu0 0.0
    %1436 = vmatprep.subr.mxu0 0.0
    %1437 = vmatpush1.msra.mxu0 0.0
    %1438 = vmatprep.subr.mxu0 0.0
    %1439 = vmatpush1.msra.mxu0 0.0
    %1440 = vmatprep.subr.mxu0 0.0
    %1441 = vmatpush1.msra.mxu0 0.0
    %1442 = vmatprep.subr.mxu0 0.0
    %1443 = vmatpush1.msra.mxu0 0.0
    %1444 = vmatprep.subr.mxu0 0.0
    %1445 = vmatpush1.msra.mxu0 0.0
    %1446 = vmatprep.subr.mxu0 0.0
    %1447 = vmatpush1.msra.mxu0 0.0
    %1448 = vmatprep.subr.mxu0 0.0
    %1449 = vmatpush1.msra.mxu0 0.0
    %1450 = vmatprep.subr.mxu0 0.0
    %1451 = vmatpush1.msra.mxu0 0.0
    %1452 = vmatprep.subr.mxu0 0.0
    %1453 = vmatpush1.msra.mxu0 0.0
    %1454 = vmatprep.subr.mxu0 0.0
    %1455 = vmatpush1.msra.mxu0 0.0
    %1456 = vmatprep.subr.mxu0 0.0
    %1457 = vmatpush1.msra.mxu0 0.0
    %1458 = vmatprep.subr.mxu0 0.0
    %1459 = vmatpush1.msra.mxu0 0.0
    %1460 = vmatprep.subr.mxu0 0.0
    %1461 = vmatpush1.msra.mxu0 0.0
    %1462 = vmatprep.subr.mxu0 0.0
    %1463 = vmatpush1.msra.mxu0 0.0
    %1464 = vmatprep.mubr.f32.mxu0 0.0
    %v1465 = vand.u32 %v1299, 4294901760
    %1466 = vmatmul.mubr.f32.gmra.mrb[0].mxu0 %v1465
    %v1467 = vpop.f32.mrb[0].mxu0
    %v1468 = vadd.f32 %v1377, %v1467
    %v1469 = vpop.f32.mrb[0].mxu0
    %1470 = vdwg.mxu0
    %1471 = vmatprep.subr.mxu0 0.0
    %v1472 = vand.u32 %v1288, 4294901760
    %v1473 = vsub.f32 %v1288, %v1472
    %1474 = vmatpush1.msra.mxu0 %v1473
    %1475 = vmatprep.subr.mxu0 0.0
    %v1476 = vand.u32 %v1289, 4294901760
    %v1477 = vsub.f32 %v1289, %v1476
    %1478 = vmatpush1.msra.mxu0 %v1477
    %1479 = vmatprep.subr.mxu0 0.0
    %v1480 = vand.u32 %v1290, 4294901760
    %v1481 = vsub.f32 %v1290, %v1480
    %1482 = vmatpush1.msra.mxu0 %v1481
    %1483 = vmatprep.subr.mxu0 0.0
    %v1484 = vand.u32 %v1291, 4294901760
    %v1485 = vsub.f32 %v1291, %v1484
    %1486 = vmatpush1.msra.mxu0 %v1485
    %1487 = vmatprep.subr.mxu0 0.0
    %1488 = vmatpush1.msra.mxu0 0.0
    %1489 = vmatprep.subr.mxu0 0.0
    %1490 = vmatpush1.msra.mxu0 0.0
    %1491 = vmatprep.subr.mxu0 0.0
    %1492 = vmatpush1.msra.mxu0 0.0
    %1493 = vmatprep.subr.mxu0 0.0
    %1494 = vmatpush1.msra.mxu0 0.0
    %1495 = vmatprep.subr.mxu0 0.0
    %1496 = vmatpush1.msra.mxu0 0.0
    %1497 = vmatprep.subr.mxu0 0.0
    %1498 = vmatpush1.msra.mxu0 0.0
    %1499 = vmatprep.subr.mxu0 0.0
    %1500 = vmatpush1.msra.mxu0 0.0
    %1501 = vmatprep.subr.mxu0 0.0
    %1502 = vmatpush1.msra.mxu0 0.0
    %1503 = vmatprep.subr.mxu0 0.0
    %1504 = vmatpush1.msra.mxu0 0.0
    %1505 = vmatprep.subr.mxu0 0.0
    %1506 = vmatpush1.msra.mxu0 0.0
    %1507 = vmatprep.subr.mxu0 0.0
    %1508 = vmatpush1.msra.mxu0 0.0
    %1509 = vmatprep.subr.mxu0 0.0
    %1510 = vmatpush1.msra.mxu0 0.0
    %1511 = vmatprep.subr.mxu0 0.0
    %1512 = vmatpush1.msra.mxu0 0.0
    %1513 = vmatprep.subr.mxu0 0.0
    %1514 = vmatpush1.msra.mxu0 0.0
    %1515 = vmatprep.subr.mxu0 0.0
    %1516 = vmatpush1.msra.mxu0 0.0
    %1517 = vmatprep.subr.mxu0 0.0
    %1518 = vmatpush1.msra.mxu0 0.0
    %1519 = vmatprep.subr.mxu0 0.0
    %1520 = vmatpush1.msra.mxu0 0.0
    %1521 = vmatprep.subr.mxu0 0.0
    %1522 = vmatpush1.msra.mxu0 0.0
    %1523 = vmatprep.subr.mxu0 0.0
    %1524 = vmatpush1.msra.mxu0 0.0
    %1525 = vmatprep.subr.mxu0 0.0
    %1526 = vmatpush1.msra.mxu0 0.0
    %1527 = vmatprep.subr.mxu0 0.0
    %1528 = vmatpush1.msra.mxu0 0.0
    %1529 = vmatprep.subr.mxu0 0.0
    %1530 = vmatpush1.msra.mxu0 0.0
    %1531 = vmatprep.subr.mxu0 0.0
    %1532 = vmatpush1.msra.mxu0 0.0
    %1533 = vmatprep.subr.mxu0 0.0
    %1534 = vmatpush1.msra.mxu0 0.0
    %1535 = vmatprep.subr.mxu0 0.0
    %1536 = vmatpush1.msra.mxu0 0.0
    %1537 = vmatprep.subr.mxu0 0.0
    %1538 = vmatpush1.msra.mxu0 0.0
    %1539 = vmatprep.subr.mxu0 0.0
    %1540 = vmatpush1.msra.mxu0 0.0
    %1541 = vmatprep.subr.mxu0 0.0
    %1542 = vmatpush1.msra.mxu0 0.0
    %1543 = vmatprep.mubr.f32.mxu0 0.0
    %v1544 = vand.u32 %v1299, 4294901760
    %v1545 = vsub.f32 %v1299, %v1544
    %1546 = vmatmul.mubr.f32.gmra.mrb[0].mxu0 %v1545
    %v1547 = vpop.f32.mrb[0].mxu0
    %v1548 = vadd.f32 %v1468, %v1547
    %v1549 = vpop.f32.mrb[0].mxu0
    %1550 = vdwg.mxu0
    %1551 = vmatprep.subr.mxu0 0.0
    %v1552 = vand.u32 %v1288, 4294901760
    %1553 = vmatpush1.msra.mxu0 %v1552
    %1554 = vmatprep.subr.mxu0 0.0
    %v1555 = vand.u32 %v1289, 4294901760
    %1556 = vmatpush1.msra.mxu0 %v1555
    %1557 = vmatprep.subr.mxu0 0.0
    %v1558 = vand.u32 %v1290, 4294901760
    %1559 = vmatpush1.msra.mxu0 %v1558
    %1560 = vmatprep.subr.mxu0 0.0
    %v1561 = vand.u32 %v1291, 4294901760
    %1562 = vmatpush1.msra.mxu0 %v1561
    %1563 = vmatprep.subr.mxu0 0.0
    %1564 = vmatpush1.msra.mxu0 0.0
    %1565 = vmatprep.subr.mxu0 0.0
    %1566 = vmatpush1.msra.mxu0 0.0
    %1567 = vmatprep.subr.mxu0 0.0
    %1568 = vmatpush1.msra.mxu0 0.0
    %1569 = vmatprep.subr.mxu0 0.0
    %1570 = vmatpush1.msra.mxu0 0.0
    %1571 = vmatprep.subr.mxu0 0.0
    %1572 = vmatpush1.msra.mxu0 0.0
    %1573 = vmatprep.subr.mxu0 0.0
    %1574 = vmatpush1.msra.mxu0 0.0
    %1575 = vmatprep.subr.mxu0 0.0
    %1576 = vmatpush1.msra.mxu0 0.0
    %1577 = vmatprep.subr.mxu0 0.0
    %1578 = vmatpush1.msra.mxu0 0.0
    %1579 = vmatprep.subr.mxu0 0.0
    %1580 = vmatpush1.msra.mxu0 0.0
    %1581 = vmatprep.subr.mxu0 0.0
    %1582 = vmatpush1.msra.mxu0 0.0
    %1583 = vmatprep.subr.mxu0 0.0
    %1584 = vmatpush1.msra.mxu0 0.0
    %1585 = vmatprep.subr.mxu0 0.0
    %1586 = vmatpush1.msra.mxu0 0.0
    %1587 = vmatprep.subr.mxu0 0.0
    %1588 = vmatpush1.msra.mxu0 0.0
    %1589 = vmatprep.subr.mxu0 0.0
    %1590 = vmatpush1.msra.mxu0 0.0
    %1591 = vmatprep.subr.mxu0 0.0
    %1592 = vmatpush1.msra.mxu0 0.0
    %1593 = vmatprep.subr.mxu0 0.0
    %1594 = vmatpush1.msra.mxu0 0.0
    %1595 = vmatprep.subr.mxu0 0.0
    %1596 = vmatpush1.msra.mxu0 0.0
    %1597 = vmatprep.subr.mxu0 0.0
    %1598 = vmatpush1.msra.mxu0 0.0
    %1599 = vmatprep.subr.mxu0 0.0
    %1600 = vmatpush1.msra.mxu0 0.0
    %1601 = vmatprep.subr.mxu0 0.0
    %1602 = vmatpush1.msra.mxu0 0.0
    %1603 = vmatprep.subr.mxu0 0.0
    %1604 = vmatpush1.msra.mxu0 0.0
    %1605 = vmatprep.subr.mxu0 0.0
    %1606 = vmatpush1.msra.mxu0 0.0
    %1607 = vmatprep.subr.mxu0 0.0
    %1608 = vmatpush1.msra.mxu0 0.0
    %1609 = vmatprep.subr.mxu0 0.0
    %1610 = vmatpush1.msra.mxu0 0.0
    %1611 = vmatprep.subr.mxu0 0.0
    %1612 = vmatpush1.msra.mxu0 0.0
    %1613 = vmatprep.subr.mxu0 0.0
    %1614 = vmatpush1.msra.mxu0 0.0
    %1615 = vmatprep.subr.mxu0 0.0
    %1616 = vmatpush1.msra.mxu0 0.0
    %1617 = vmatprep.subr.mxu0 0.0
    %1618 = vmatpush1.msra.mxu0 0.0
    %1619 = vmatprep.mubr.f32.mxu0 0.0
    %v1620 = vand.u32 %v1299, 4294901760
    %v1621 = vsub.f32 %v1299, %v1620
    %v1622 = vand.u32 %v1621, 4294901760
    %1623 = vmatmul.mubr.f32.gmra.mrb[0].mxu0 %v1622
    %v1624 = vpop.f32.mrb[0].mxu0
    %v1625 = vadd.f32 %v1548, %v1624
    %v1626 = vpop.f32.mrb[0].mxu0
    %1627 = vdwg.mxu0
    %1628 = vmatprep.subr.mxu0 0.0
    %v1629 = vand.u32 %v1288, 4294901760
    %v1630 = vsub.f32 %v1288, %v1629
    %v1631 = vand.u32 %v1630, 4294901760
    %1632 = vmatpush1.msra.mxu0 %v1631
    %1633 = vmatprep.subr.mxu0 0.0
    %v1634 = vand.u32 %v1289, 4294901760
    %v1635 = vsub.f32 %v1289, %v1634
    %v1636 = vand.u32 %v1635, 4294901760
    %1637 = vmatpush1.msra.mxu0 %v1636
    %1638 = vmatprep.subr.mxu0 0.0
    %v1639 = vand.u32 %v1290, 4294901760
    %v1640 = vsub.f32 %v1290, %v1639
    %v1641 = vand.u32 %v1640, 4294901760
    %1642 = vmatpush1.msra.mxu0 %v1641
    %1643 = vmatprep.subr.mxu0 0.0
    %v1644 = vand.u32 %v1291, 4294901760
    %v1645 = vsub.f32 %v1291, %v1644
    %v1646 = vand.u32 %v1645, 4294901760
    %1647 = vmatpush1.msra.mxu0 %v1646
    %1648 = vmatprep.subr.mxu0 0.0
    %1649 = vmatpush1.msra.mxu0 0.0
    %1650 = vmatprep.subr.mxu0 0.0
    %1651 = vmatpush1.msra.mxu0 0.0
    %1652 = vmatprep.subr.mxu0 0.0
    %1653 = vmatpush1.msra.mxu0 0.0
    %1654 = vmatprep.subr.mxu0 0.0
    %1655 = vmatpush1.msra.mxu0 0.0
    %1656 = vmatprep.subr.mxu0 0.0
    %1657 = vmatpush1.msra.mxu0 0.0
    %1658 = vmatprep.subr.mxu0 0.0
    %1659 = vmatpush1.msra.mxu0 0.0
    %1660 = vmatprep.subr.mxu0 0.0
    %1661 = vmatpush1.msra.mxu0 0.0
    %1662 = vmatprep.subr.mxu0 0.0
    %1663 = vmatpush1.msra.mxu0 0.0
    %1664 = vmatprep.subr.mxu0 0.0
    %1665 = vmatpush1.msra.mxu0 0.0
    %1666 = vmatprep.subr.mxu0 0.0
    %1667 = vmatpush1.msra.mxu0 0.0
    %1668 = vmatprep.subr.mxu0 0.0
    %1669 = vmatpush1.msra.mxu0 0.0
    %1670 = vmatprep.subr.mxu0 0.0
    %1671 = vmatpush1.msra.mxu0 0.0
    %1672 = vmatprep.subr.mxu0 0.0
    %1673 = vmatpush1.msra.mxu0 0.0
    %1674 = vmatprep.subr.mxu0 0.0
    %1675 = vmatpush1.msra.mxu0 0.0
    %1676 = vmatprep.subr.mxu0 0.0
    %1677 = vmatpush1.msra.mxu0 0.0
    %1678 = vmatprep.subr.mxu0 0.0
    %1679 = vmatpush1.msra.mxu0 0.0
    %1680 = vmatprep.subr.mxu0 0.0
    %1681 = vmatpush1.msra.mxu0 0.0
    %1682 = vmatprep.subr.mxu0 0.0
    %1683 = vmatpush1.msra.mxu0 0.0
    %1684 = vmatprep.subr.mxu0 0.0
    %1685 = vmatpush1.msra.mxu0 0.0
    %1686 = vmatprep.subr.mxu0 0.0
    %1687 = vmatpush1.msra.mxu0 0.0
    %1688 = vmatprep.subr.mxu0 0.0
    %1689 = vmatpush1.msra.mxu0 0.0
    %1690 = vmatprep.subr.mxu0 0.0
    %1691 = vmatpush1.msra.mxu0 0.0
    %1692 = vmatprep.subr.mxu0 0.0
    %1693 = vmatpush1.msra.mxu0 0.0
    %1694 = vmatprep.subr.mxu0 0.0
    %1695 = vmatpush1.msra.mxu0 0.0
    %1696 = vmatprep.subr.mxu0 0.0
    %1697 = vmatpush1.msra.mxu0 0.0
    %1698 = vmatprep.subr.mxu0 0.0
    %1699 = vmatpush1.msra.mxu0 0.0
    %1700 = vmatprep.subr.mxu0 0.0
    %1701 = vmatpush1.msra.mxu0 0.0
    %1702 = vmatprep.subr.mxu0 0.0
    %1703 = vmatpush1.msra.mxu0 0.0
    %1704 = vmatprep.mubr.f32.mxu0 0.0
    %v1705 = vand.u32 %v1299, 4294901760
    %1706 = vmatmul.mubr.f32.gmra.mrb[0].mxu0 %v1705
    %v1707 = vpop.f32.mrb[0].mxu0
    %v1708 = vadd.f32 %v1625, %v1707
    %v1709 = vpop.f32.mrb[0].mxu0
    %1710 = vdwg.mxu0
    %1711 = vmatprep.subr.mxu0 0.0
    %v1712 = vand.u32 %v1288, 4294901760
    %1713 = vmatpush1.msra.mxu0 %v1712
    %1714 = vmatprep.subr.mxu0 0.0
    %v1715 = vand.u32 %v1289, 4294901760
    %1716 = vmatpush1.msra.mxu0 %v1715
    %1717 = vmatprep.subr.mxu0 0.0
    %v1718 = vand.u32 %v1290, 4294901760
    %1719 = vmatpush1.msra.mxu0 %v1718
    %1720 = vmatprep.subr.mxu0 0.0
    %v1721 = vand.u32 %v1291, 4294901760
    %1722 = vmatpush1.msra.mxu0 %v1721
    %1723 = vmatprep.subr.mxu0 0.0
    %1724 = vmatpush1.msra.mxu0 0.0
    %1725 = vmatprep.subr.mxu0 0.0
    %1726 = vmatpush1.msra.mxu0 0.0
    %1727 = vmatprep.subr.mxu0 0.0
    %1728 = vmatpush1.msra.mxu0 0.0
    %1729 = vmatprep.subr.mxu0 0.0
    %1730 = vmatpush1.msra.mxu0 0.0
    %1731 = vmatprep.subr.mxu0 0.0
    %1732 = vmatpush1.msra.mxu0 0.0
    %1733 = vmatprep.subr.mxu0 0.0
    %1734 = vmatpush1.msra.mxu0 0.0
    %1735 = vmatprep.subr.mxu0 0.0
    %1736 = vmatpush1.msra.mxu0 0.0
    %1737 = vmatprep.subr.mxu0 0.0
    %1738 = vmatpush1.msra.mxu0 0.0
    %1739 = vmatprep.subr.mxu0 0.0
    %1740 = vmatpush1.msra.mxu0 0.0
    %1741 = vmatprep.subr.mxu0 0.0
    %1742 = vmatpush1.msra.mxu0 0.0
    %1743 = vmatprep.subr.mxu0 0.0
    %1744 = vmatpush1.msra.mxu0 0.0
    %1745 = vmatprep.subr.mxu0 0.0
    %1746 = vmatpush1.msra.mxu0 0.0
    %1747 = vmatprep.subr.mxu0 0.0
    %1748 = vmatpush1.msra.mxu0 0.0
    %1749 = vmatprep.subr.mxu0 0.0
    %1750 = vmatpush1.msra.mxu0 0.0
    %1751 = vmatprep.subr.mxu0 0.0
    %1752 = vmatpush1.msra.mxu0 0.0
    %1753 = vmatprep.subr.mxu0 0.0
    %1754 = vmatpush1.msra.mxu0 0.0
    %1755 = vmatprep.subr.mxu0 0.0
    %1756 = vmatpush1.msra.mxu0 0.0
    %1757 = vmatprep.subr.mxu0 0.0
    %1758 = vmatpush1.msra.mxu0 0.0
    %1759 = vmatprep.subr.mxu0 0.0
    %1760 = vmatpush1.msra.mxu0 0.0
    %1761 = vmatprep.subr.mxu0 0.0
    %1762 = vmatpush1.msra.mxu0 0.0
    %1763 = vmatprep.subr.mxu0 0.0
    %1764 = vmatpush1.msra.mxu0 0.0
    %1765 = vmatprep.subr.mxu0 0.0
    %1766 = vmatpush1.msra.mxu0 0.0
    %1767 = vmatprep.subr.mxu0 0.0
    %1768 = vmatpush1.msra.mxu0 0.0
    %1769 = vmatprep.subr.mxu0 0.0
    %1770 = vmatpush1.msra.mxu0 0.0
    %1771 = vmatprep.subr.mxu0 0.0
    %1772 = vmatpush1.msra.mxu0 0.0
    %1773 = vmatprep.subr.mxu0 0.0
    %1774 = vmatpush1.msra.mxu0 0.0
    %1775 = vmatprep.subr.mxu0 0.0
    %1776 = vmatpush1.msra.mxu0 0.0
    %1777 = vmatprep.subr.mxu0 0.0
    %1778 = vmatpush1.msra.mxu0 0.0
    %1779 = vmatprep.mubr.f32.mxu0 0.0
    %v1780 = vand.u32 %v1299, 4294901760
    %1781 = vmatmul.mubr.f32.gmra.mrb[0].mxu0 %v1780
    %v1782 = vpop.f32.mrb[0].mxu0
    %v1783 = vadd.f32 %v1708, %v1782
    %v1784 = vpop.f32.mrb[0].mxu0
    %1785 = vdwg.mxu0
    %vm1786 = vcmask 125952
    %1787 = vst.msk [vmem:[#allocation8] sm:$0xf] %vm1786, %v1783
    // Predicated region
    $region42: #{decoder_forward.1} parent=1 // pred_check
      _
    $region43: #{decoder_forward.1} parent=1 // pred_check_branch
      %1789 = sbr.rel (0) target = $region45
    $region44: #{decoder_forward.1} parent=1 // pred_region
      %s1791 = ssub.s32 64, 64
      %1792 = vsyncadd [#allocation5], %s1791
      %s1794 = sshll.u32 [#allocation8], 4
      %s1795 = int_to_ptr.vmem [resolvable:$true] %s1794
      %1797 = dma.vmem_to_hbm [thread:$0]  %s1795, 64, %s8, [#allocation5]
    $region45: #{decoder_forward.1} parent=1 // pred_fallthru
      _
    // Predicated region
    $region46: #{decoder_forward.1} parent=1 // pred_check
      _
    $region47: #{decoder_forward.1} parent=1 // pred_check_branch
      %1799 = sbr.rel (0) target = $region49
    $region48: #{decoder_forward.1} parent=1 // pred_region
      %s1801 = ssub.s32 128, 128
      %1802 = vsyncadd [#allocation10], %s1801
      %s1803 = sshll.u32 [#allocation9], 4
      %s1804 = int_to_ptr.vmem [resolvable:$true] %s1803
      %1809 = dma.vmem_to_hbm [thread:$0]  %s1804, 128, %s9, [#allocation10], 64, 64, 4
    $region49: #{decoder_forward.1} parent=1 // pred_fallthru
      _
    // Predicated region
    $region50: #{decoder_forward.1} parent=1 // pred_check
      _
    $region51: #{decoder_forward.1} parent=1 // pred_check_branch
      %1811 = sbr.rel (0) target = $region53
    $region52: #{decoder_forward.1} parent=1 // pred_region
      %s1813 = ssub.s32 128, 128
      %1814 = vsyncadd [#allocation10], %s1813
      %s1815 = sshll.u32 [#allocation11], 4
      %s1816 = int_to_ptr.vmem [resolvable:$true] %s1815
      %1821 = dma.vmem_to_hbm [thread:$0]  %s1816, 128, %s10, [#allocation10], 64, 64, 4
    $region53: #{decoder_forward.1} parent=1 // pred_fallthru
      _
    // Predicated region
    $region54: #{decoder_forward.1} parent=1 // pred_check
      _
    $region55: #{decoder_forward.1} parent=1 // pred_check_branch
      %1823 = sbr.rel (0) target = $region57
    $region56: #{decoder_forward.1} parent=1 // pred_region
      %1824 = dma.done [#allocation5], 64
    $region57: #{decoder_forward.1} parent=1 // pred_fallthru
      _
    // Predicated region
    $region58: #{decoder_forward.1} parent=1 // pred_check
      _
    $region59: #{decoder_forward.1} parent=1 // pred_check_branch
      %1826 = sbr.rel (0) target = $region61
    $region60: #{decoder_forward.1} parent=1 // pred_region
      %1827 = dma.done [#allocation10], 128
    $region61: #{decoder_forward.1} parent=1 // pred_fallthru
      _
    // Predicated region
    $region62: #{decoder_forward.1} parent=1 // pred_check
      _
    $region63: #{decoder_forward.1} parent=1 // pred_check_branch
      %1829 = sbr.rel (0) target = $region65
    $region64: #{decoder_forward.1} parent=1 // pred_region
      %1830 = dma.done [#allocation10], 128
    $region65: #{decoder_forward.1} parent=1 // pred_fallthru
      _
    %1831 = vsyncpa [#allocation4], 1
    %1832 = vsyncpa [#allocation5], 1
    %1833 = vsyncpa [#allocation10], 1
    %1834 = vsyncpa [#allocation6], 1

</llo_original>
